<compile_context>
chip_gen: v7x
topology: tpu7x:2x2x1
jax: 0.10.0
libtpu: 0.0.40
codegen_flags: <defaults>
</compile_context>

<pallas_src>
from functools import partial

import jax
import jax.numpy as jnp
from jax.experimental import pallas as pl
from jax.experimental.pallas import tpu as pltpu

LANE = 128        # vreg lane width (last dim)
SUBLANE = 8       # vreg sublane count (second-to-last dim)
ROW_TILE = 256    # A row-tile: multiple of 256 -> full 256x256 MXU on v6e/v7x
_MIB = 1024 * 1024


def _round_up(x, m):
    return (x + m - 1) // m * m


def _vmem_capacity_bytes():
    try:
        return int(pltpu.get_tpu_info().vmem_capacity_bytes)
    except Exception:              # interpreter / older runtimes
        return 64 * _MIB           # conservative: v7x has the smallest VMEM


# ----------------------------------------------------------------------------
# Fused Pallas kernel: (L-1)x [A-streamed GCNConv+ReLU] -> folded last conv
#                      -> global_mean_pool -> dropout(eval) -> Linear
# ----------------------------------------------------------------------------
def fused_gcn_kernel(a_ref, x_ref, w_ref, b_ref, pa_ref, wl_ref, bl_ref,
                     o_ref, h_ref):
    # a_ref : bf16 [TM, Np]       streamed row tile of normalized adjacency
    # x_ref : bf16 [Np, Fp]       node features (resident)
    # w_ref : bf16 [L, Fp, Fp]    stacked GCN weights (L = total convs)
    # b_ref : f32  [L, 1, Fp]     stacked GCN biases
    # pa_ref: bf16 [Gp, Np]       P @ A_hat  (mean-pool folded with last conv)
    # wl_ref: bf16 [Fp, Pp]       final Linear weight
    # bl_ref: f32  [1, Pp]        final Linear bias
    # o_ref : f32  [Gp, Pp]       logits (written once, at last grid step)
    # h_ref : bf16 [2, Np, Fp]    ping-pong activation scratch
    l = pl.program_id(0)                  # A-streamed conv layer index
    i = pl.program_id(1)                  # row-tile index
    n_tiles = pl.num_programs(1)
    num_a_layers = w_ref.shape[0] - 1     # last conv is folded into pooling
    tm = a_ref.shape[0]

    # Seed the ping-pong buffer with the input features once.
    @pl.when((l == 0) & (i == 0))
    def _():
        h_ref[0] = x_ref[...]

    cur = l % 2                           # layer input buffer
    row0 = pl.multiple_of(i * tm, tm)

    # (A_tile @ H) @ W_l : same total FLOPs as A @ (H @ W_l), no XW scratch.
    ah = jnp.dot(a_ref[...], h_ref[cur], preferred_element_type=jnp.float32)
    out_t = jnp.dot(ah.astype(jnp.bfloat16), w_ref[l],
                    preferred_element_type=jnp.float32)
    out_t = jnp.maximum(out_t + b_ref[l], 0.0)          # bias + ReLU
    out_bf16 = out_t.astype(jnp.bfloat16)

    # Store into the other buffer (static leading index in each branch).
    @pl.when(cur == 0)
    def _():
        h_ref[1, pl.ds(row0, tm), :] = out_bf16

    @pl.when(cur == 1)
    def _():
        h_ref[0, pl.ds(row0, tm), :] = out_bf16

    # Epilogue: folded last conv + mean pool + dropout(eval) + Linear.
    @pl.when((l == num_a_layers - 1) & (i == n_tiles - 1))
    def _():
        h_last = h_ref[num_a_layers % 2]                 # output of last A-layer
        # pooled = (PA @ H) @ W4 + b4  ==  P @ (A @ (H @ W4) + b4) on real rows
        pa_h = jnp.dot(pa_ref[...], h_last, preferred_element_type=jnp.float32)
        pooled = jnp.dot(pa_h.astype(jnp.bfloat16), w_ref[num_a_layers],
                         preferred_element_type=jnp.float32) + b_ref[num_a_layers]
        # TODO(synk): F.dropout(p=0.5, training=self.training) — identity in eval.
        o_ref[...] = jnp.dot(pooled.astype(jnp.bfloat16), wl_ref[...],
                             preferred_element_type=jnp.float32) + bl_ref[...]


# ----------------------------------------------------------------------------
# Graph glue (plain JAX, built directly at padded shapes, fused under jit)
# ----------------------------------------------------------------------------
def build_norm_adjacency_padded(edge_index, num_nodes, n_pad):
    """Dense GCN-normalized adjacency D^-1/2 (A + I) D^-1/2 at padded shape.

    Padding rows/cols are exactly zero (deg=0 -> scale 0)."""
    src, dst = edge_index[0], edge_index[1]
    adj = jnp.zeros((n_pad, n_pad), jnp.float32)
    adj = adj.at[dst, src].set(1.0)                    # message flows src -> dst
    self_loop = (jnp.arange(n_pad) < num_nodes).astype(jnp.float32)
    adj = adj + jnp.diag(self_loop)                    # self loops on real nodes
    deg = jnp.sum(adj, axis=1)
    d_inv_sqrt = jnp.where(deg > 0, jax.lax.rsqrt(deg), 0.0)
    return d_inv_sqrt[:, None] * adj * d_inv_sqrt[None, :]


def build_pool_matrix_padded(batch, num_graphs, num_nodes, g_pad, n_pad):
    """P[g, n] = 1/count(g) if batch[n] == g else 0 (global_mean_pool)."""
    batch_p = jnp.pad(batch.astype(jnp.int32), (0, n_pad - num_nodes),
                      constant_values=-1)
    one_hot = (batch_p[None, :] ==
               jnp.arange(g_pad, dtype=jnp.int32)[:, None]).astype(jnp.float32)
    counts = jnp.maximum(one_hot.sum(axis=1, keepdims=True), 1.0)
    return one_hot / counts


# ----------------------------------------------------------------------------
# Model
# ----------------------------------------------------------------------------
def init_params(key, n_f, hidden, n_hlin, n_pred):
    ks = jax.random.split(key, 10)

    def glorot(k, fan_in, fan_out):
        scale = jnp.sqrt(6.0 / (fan_in + fan_out))
        return jax.random.uniform(k, (fan_in, fan_out), jnp.float32, -scale, scale)

    return {
        "w1": glorot(ks[0], n_f, hidden),     "b1": jnp.zeros((hidden,), jnp.float32),
        "w2": glorot(ks[1], hidden, hidden),  "b2": jnp.zeros((hidden,), jnp.float32),
        "w3": glorot(ks[2], hidden, hidden),  "b3": jnp.zeros((hidden,), jnp.float32),
        "w4": glorot(ks[3], hidden, n_hlin),  "b4": jnp.zeros((n_hlin,), jnp.float32),
        "w_lin": glorot(ks[4], n_hlin, n_pred),
        "b_lin": jax.random.uniform(ks[5], (n_pred,), jnp.float32, -0.1, 0.1),
    }


@partial(jax.jit, static_argnames=("num_graphs",))
def gcn_forward(params, x, edge_index, batch, num_graphs):
    n, n_f = x.shape
    ws = [params["w1"], params["w2"], params["w3"], params["w4"]]
    bs = [params["b1"], params["b2"], params["b3"], params["b4"]]
    w_lin, b_lin = params["w_lin"], params["b_lin"]
    n_pred = w_lin.shape[1]
    num_convs = len(ws)
    num_a_layers = num_convs - 1            # last conv folded into pooling

    # Padded shapes (zeros in padding never contaminate real outputs: padded
    # A rows/cols, PA cols, W rows/cols and biases are all zero).
    n_pad = _round_up(max(n, 1), ROW_TILE)
    f_pad = _round_up(max([n_f] + [w.shape[1] for w in ws] + [w_lin.shape[0]]), LANE)
    g_pad = _round_up(max(num_graphs, 1), SUBLANE)
    p_pad = _round_up(max(n_pred, 1), LANE)
    tm = min(ROW_TILE, n_pad)
    n_tiles = n_pad // tm

    a_f32 = build_norm_adjacency_padded(edge_index, n, n_pad)
    pool = build_pool_matrix_padded(batch, num_graphs, n, g_pad, n_pad)
    pa = jnp.dot(pool, a_f32)                        # fold: P @ A_hat

    def pad2(m, r, c):
        return jnp.pad(m, ((0, r - m.shape[0]), (0, c - m.shape[1])))

    a_p = a_f32.astype(jnp.bfloat16)
    x_p = pad2(x, n_pad, f_pad).astype(jnp.bfloat16)
    pa_p = pa.astype(jnp.bfloat16)
    w_stack = jnp.stack([pad2(w, f_pad, f_pad) for w in ws]).astype(jnp.bfloat16)
    b_stack = jnp.stack([jnp.pad(b, (0, f_pad - b.shape[0]))[None, :] for b in bs]
                        ).astype(jnp.float32)
    wl_p = pad2(w_lin, f_pad, p_pad).astype(jnp.bfloat16)
    bl_p = jnp.pad(b_lin, (0, p_pad - n_pred))[None, :].astype(jnp.float32)

    # VMEM budget from the *streamed* working set, clamped to ~85% of the
    # physical VMEM reported for this chip (128 MiB v5e/v6e, 64 MiB v7x).
    b16, b32 = 2, 4
    resident = (2 * n_pad * f_pad * b16              # H ping-pong scratch
                + 2 * tm * n_pad * b16               # double-buffered A tiles
                + 2 * n_pad * f_pad * b16            # x
                + 2 * (num_convs * f_pad * f_pad * b16 + num_convs * f_pad * b32)
                + 2 * g_pad * n_pad * b16            # PA
                + 2 * (f_pad * p_pad * b16 + p_pad * b32)
                + 2 * g_pad * p_pad * b32)           # output
    vmem_ceiling = int(0.85 * _vmem_capacity_bytes())
    vmem_limit = int(min(max(2 * resident, 32 * _MIB), vmem_ceiling))

    flops = (2 * num_a_layers * (n_pad * n_pad * f_pad + n_pad * f_pad * f_pad)
             + 2 * g_pad * (n_pad * f_pad + f_pad * f_pad + f_pad * p_pad))
    bytes_accessed = (num_a_layers * n_pad * n_pad * b16    # A re-read per layer
                      + n_pad * f_pad * b16                 # x
                      + g_pad * n_pad * b16                 # PA
                      + num_convs * f_pad * f_pad * b16     # W stack
                      + num_convs * f_pad * b32             # biases
                      + f_pad * p_pad * b16 + p_pad * b32   # final Linear
                      + g_pad * p_pad * b32)                # output
    cost = pl.CostEstimate(flops=flops, transcendentals=0,
                           bytes_accessed=bytes_accessed)

    def full_spec(shape):
        return pl.BlockSpec(shape, lambda l, i: (0,) * len(shape))

    out_pad = pl.pallas_call(
        fused_gcn_kernel,
        out_shape=jax.ShapeDtypeStruct((g_pad, p_pad), jnp.float32),
        grid_spec=pltpu.PrefetchScalarGridSpec(
            num_scalar_prefetch=0,
            grid=(num_a_layers, n_tiles),
            in_specs=[
                # Streamed A row tiles (default double-buffering; consider
                # pl.Buffered(3) on v5e if the A DMA is still exposed).
                pl.BlockSpec((tm, n_pad), lambda l, i: (i, 0)),
                full_spec((n_pad, f_pad)),               # x (resident)
                full_spec((num_convs, f_pad, f_pad)),    # W stack (resident)
                full_spec((num_convs, 1, f_pad)),        # b stack (resident)
                full_spec((g_pad, n_pad)),               # PA (resident)
                full_spec((f_pad, p_pad)),               # W_lin
                full_spec((1, p_pad)),                   # b_lin
            ],
            out_specs=pl.BlockSpec((g_pad, p_pad), lambda l, i: (0, 0)),
            scratch_shapes=[pltpu.VMEM((2, n_pad, f_pad), jnp.bfloat16)],
        ),
        compiler_params=pltpu.CompilerParams(
            # Both axes sequential: layer axis carries the H dependency and the
            # row axis shares the per-core H ping-pong scratch.
            dimension_semantics=("arbitrary", "arbitrary"),
            vmem_limit_bytes=vmem_limit),
        cost_estimate=cost,
    )(a_p, x_p, w_stack, b_stack, pa_p, wl_p, bl_p)

    return out_pad[:num_graphs, :n_pred]


# ----------------------------------------------------------------------------
# Pure-JAX f32 reference (same math, unfused) for a sanity check
# ----------------------------------------------------------------------------
def reference_forward(params, x, edge_index, batch, num_graphs):
    n = x.shape[0]
    a = build_norm_adjacency_padded(edge_index, n, n)
    pool = build_pool_matrix_padded(batch, num_graphs, n, num_graphs, n)
    ws = [params["w1"], params["w2"], params["w3"], params["w4"]]
    bs = [params["b1"], params["b2"], params["b3"], params["b4"]]
    h = x
    for i, (w, b) in enumerate(zip(ws, bs)):
        h = a @ (h @ w) + b
        if i < len(ws) - 1:
            h = jnp.maximum(h, 0.0)
    pooled = pool @ h
    return pooled @ params["w_lin"] + params["b_lin"]


# ----------------------------------------------------------------------------
if __name__ == "__main__":
    key = jax.random.PRNGKey(0)
    k_x, k_p = jax.random.split(key)

    n_f, hidden, n_hlin, n_pred = 4, 32, 32, 2
    nodes_per_graph, num_graphs = 8, 2
    num_nodes = nodes_per_graph * num_graphs

    # Node features
    x = jax.random.normal(k_x, (num_nodes, n_f), jnp.float32)

    # Two disjoint ring graphs (undirected: both directions listed)
    src, dst = [], []
    for g in range(num_graphs):
        base = g * nodes_per_graph
        for i in range(nodes_per_graph):
            a, b = base + i, base + (i + 1) % nodes_per_graph
            src += [a, b]
            dst += [b, a]
    edge_index = jnp.array([src, dst], dtype=jnp.int32)

    # Graph assignment vector
    batch = jnp.repeat(jnp.arange(num_graphs, dtype=jnp.int32), nodes_per_graph)

    params = init_params(k_p, n_f, hidden, n_hlin, n_pred)

    out = gcn_forward(params, x, edge_index, batch, num_graphs)
    out = jax.block_until_ready(out)
    assert out.shape == (num_graphs, n_pred)
    assert bool(jnp.all(jnp.isfinite(out)))

    ref = reference_forward(params, x, edge_index, batch, num_graphs)
    assert bool(jnp.allclose(out, ref, atol=1e-1, rtol=1e-1)), (out, ref)

    print("KERNEL_OK")
</pallas_src>

<mosaic_0001>
module attributes {stable_mosaic.version = 11 : i64} {
  func.func @fused_gcn_kernel(%arg0: i32, %arg1: i32, %arg2: memref<256x256xbf16, #tpu.memory_space<vmem>>, %arg3: memref<256x128xbf16, #tpu.memory_space<vmem>>, %arg4: memref<4x128x128xbf16, #tpu.memory_space<vmem>>, %arg5: memref<4x1x128xf32, #tpu.memory_space<vmem>>, %arg6: memref<8x256xbf16, #tpu.memory_space<vmem>>, %arg7: memref<128x128xbf16, #tpu.memory_space<vmem>>, %arg8: memref<1x128xf32, #tpu.memory_space<vmem>>, %arg9: memref<8x128xf32, #tpu.memory_space<vmem>>, %arg10: memref<2x256x128xbf16, #tpu.memory_space<vmem>>) attributes {dimension_semantics = [#tpu.dimension_semantics<arbitrary>, #tpu.dimension_semantics<arbitrary>], iteration_bounds = array<i64: 3, 1>, scalar_prefetch = 0 : i64, scratch_operands = 1 : i64, tpu.core_type = #tpu.core_type<tc>, window_params = [{transform_indices = @transform_0, window_bounds = array<i64: 256, 256>}, {pipeline_mode = #tpu.pipeline_mode<synchronous>, transform_indices = @transform_1, window_bounds = array<i64: 256, 128>}, {pipeline_mode = #tpu.pipeline_mode<synchronous>, transform_indices = @transform_2, window_bounds = array<i64: 4, 128, 128>}, {pipeline_mode = #tpu.pipeline_mode<synchronous>, transform_indices = @transform_3, window_bounds = array<i64: 4, 1, 128>}, {pipeline_mode = #tpu.pipeline_mode<synchronous>, transform_indices = @transform_4, window_bounds = array<i64: 8, 256>}, {pipeline_mode = #tpu.pipeline_mode<synchronous>, transform_indices = @transform_5, window_bounds = array<i64: 128, 128>}, {pipeline_mode = #tpu.pipeline_mode<synchronous>, transform_indices = @transform_6, window_bounds = array<i64: 1, 128>}, {pipeline_mode = #tpu.pipeline_mode<synchronous>, transform_indices = @transform_7, window_bounds = array<i64: 8, 128>}]} {
    %c0_i32 = arith.constant 0 : i32
    %0 = arith.cmpi eq, %arg0, %c0_i32 : i32
    %c0_i32_0 = arith.constant 0 : i32
    %1 = arith.cmpi eq, %arg1, %c0_i32_0 : i32
    %2 = arith.andi %0, %1 : i1
    %3 = arith.extui %2 : i1 to i32
    %c0_i32_1 = arith.constant 0 : i32
    %4 = arith.cmpi ne, %3, %c0_i32_1 : i32
    scf.if %4 {
      %c0_22 = arith.constant 0 : index
      %c0_23 = arith.constant 0 : index
      %46 = vector.load %arg3[%c0_22, %c0_23] : memref<256x128xbf16, #tpu.memory_space<vmem>>, vector<256x128xbf16>
      %c0_24 = arith.constant 0 : index
      %c0_25 = arith.constant 0 : index
      %c0_26 = arith.constant 0 : index
      %47 = vector.load %arg10[%c0_24, %c0_25, %c0_26] : memref<2x256x128xbf16, #tpu.memory_space<vmem>>, vector<1x256x128xbf16>
      %48 = vector.shape_cast %47 : vector<1x256x128xbf16> to vector<256x128xbf16>
      %49 = vector.shape_cast %46 : vector<256x128xbf16> to vector<1x256x128xbf16>
      tpu.vector_store %arg10[%c0_24, %c0_25, %c0_26], %49 {strides = array<i32>} : memref<2x256x128xbf16, #tpu.memory_space<vmem>>, vector<1x256x128xbf16>,
    } else {
    }
    %c2_i32 = arith.constant 2 : i32
    %c0_i32_2 = arith.constant 0 : i32
    %5 = arith.cmpi eq, %c2_i32, %c0_i32_2 : i32
    %c1_i32 = arith.constant 1 : i32
    %6 = arith.select %5, %c1_i32, %c2_i32 : i32
    %7 = arith.remsi %arg0, %6 : i32
    %c0_i32_3 = arith.constant 0 : i32
    %8 = arith.cmpi ne, %7, %c0_i32_3 : i32
    %c0_i32_4 = arith.constant 0 : i32
    %9 = arith.cmpi slt, %7, %c0_i32_4 : i32
    %c0_i32_5 = arith.constant 0 : i32
    %10 = arith.cmpi slt, %6, %c0_i32_5 : i32
    %11 = arith.xori %9, %10 : i1
    %12 = arith.andi %11, %8 : i1
    %13 = arith.addi %7, %6 : i32
    %14 = arith.select %12, %13, %7 : i32
    %c256_i32 = arith.constant 256 : i32
    %15 = arith.muli %arg1, %c256_i32 : i32
    %16 = tpu.assume_multiple %15, 256 : i32
    %c0 = arith.constant 0 : index
    %c0_6 = arith.constant 0 : index
    %17 = vector.load %arg2[%c0, %c0_6] : memref<256x256xbf16, #tpu.memory_space<vmem>>, vector<256x256xbf16>
    %18 = arith.index_cast %14 : i32 to index
    %c0_7 = arith.constant 0 : index
    %c0_8 = arith.constant 0 : index
    %19 = vector.load %arg10[%18, %c0_7, %c0_8] : memref<2x256x128xbf16, #tpu.memory_space<vmem>>, vector<1x256x128xbf16>
    %20 = vector.shape_cast %19 : vector<1x256x128xbf16> to vector<256x128xbf16>
    %cst = arith.constant dense<0.000000e+00> : vector<256x128xf32>
    %21 = tpu.matmul %17, %20, %cst {dimension_numbers = #tpu.dot_dimension_numbers<[1], [0], [0], [1], [0, 0, 1, 1], [], []>} : vector<256x256xbf16>, vector<256x128xbf16>, vector<256x128xf32> -> vector<256x128xf32>
    %22 = arith.truncf %21 : vector<256x128xf32> to vector<256x128xbf16>
    %23 = arith.index_cast %arg0 : i32 to index
    %c0_9 = arith.constant 0 : index
    %c0_10 = arith.constant 0 : index
    %24 = vector.load %arg4[%23, %c0_9, %c0_10] : memref<4x128x128xbf16, #tpu.memory_space<vmem>>, vector<1x128x128xbf16>
    %25 = vector.shape_cast %24 : vector<1x128x128xbf16> to vector<128x128xbf16>
    %cst_11 = arith.constant dense<0.000000e+00> : vector<256x128xf32>
    %26 = tpu.matmul %22, %25, %cst_11 {dimension_numbers = #tpu.dot_dimension_numbers<[1], [0], [0], [1], [0, 0, 1, 1], [], []>} : vector<256x128xbf16>, vector<128x128xbf16>, vector<256x128xf32> -> vector<256x128xf32>
    %27 = arith.index_cast %arg0 : i32 to index
    %c0_12 = arith.constant 0 : index
    %c0_13 = arith.constant 0 : index
    %28 = vector.load %arg5[%27, %c0_12, %c0_13] : memref<4x1x128xf32, #tpu.memory_space<vmem>>, vector<1x1x128xf32>
    %29 = vector.shape_cast %28 : vector<1x1x128xf32> to vector<1x128xf32>
    %30 = vector.broadcast %29 : vector<1x128xf32> to vector<256x128xf32>
    %31 = arith.addf %26, %30 : vector<256x128xf32>
    %cst_14 = arith.constant 0.000000e+00 : f32
    %32 = vector.broadcast %cst_14 : f32 to vector<256x128xf32>
    %33 = arith.maximumf %31, %32 : vector<256x128xf32>
    %34 = arith.truncf %33 : vector<256x128xf32> to vector<256x128xbf16>
    %c0_i32_15 = arith.constant 0 : i32
    %35 = arith.cmpi eq, %14, %c0_i32_15 : i32
    %36 = arith.extui %35 : i1 to i32
    %c0_i32_16 = arith.constant 0 : i32
    %37 = arith.cmpi ne, %36, %c0_i32_16 : i32
    scf.if %37 {
      %c1 = arith.constant 1 : index
      %46 = arith.index_cast %16 : i32 to index
      %c0_22 = arith.constant 0 : index
      %47 = vector.load %arg10[%c1, %46, %c0_22] : memref<2x256x128xbf16, #tpu.memory_space<vmem>>, vector<1x256x128xbf16>
      %48 = vector.shape_cast %47 : vector<1x256x128xbf16> to vector<256x128xbf16>
      %49 = vector.shape_cast %34 : vector<256x128xbf16> to vector<1x256x128xbf16>
      tpu.vector_store %arg10[%c1, %46, %c0_22], %49 {strides = array<i32>} : memref<2x256x128xbf16, #tpu.memory_space<vmem>>, vector<1x256x128xbf16>,
    } else {
    }
    %c1_i32_17 = arith.constant 1 : i32
    %38 = arith.cmpi eq, %14, %c1_i32_17 : i32
    %39 = arith.extui %38 : i1 to i32
    %c0_i32_18 = arith.constant 0 : i32
    %40 = arith.cmpi ne, %39, %c0_i32_18 : i32
    scf.if %40 {
      %c0_22 = arith.constant 0 : index
      %46 = arith.index_cast %16 : i32 to index
      %c0_23 = arith.constant 0 : index
      %47 = vector.load %arg10[%c0_22, %46, %c0_23] : memref<2x256x128xbf16, #tpu.memory_space<vmem>>, vector<1x256x128xbf16>
      %48 = vector.shape_cast %47 : vector<1x256x128xbf16> to vector<256x128xbf16>
      %49 = vector.shape_cast %34 : vector<256x128xbf16> to vector<1x256x128xbf16>
      tpu.vector_store %arg10[%c0_22, %46, %c0_23], %49 {strides = array<i32>} : memref<2x256x128xbf16, #tpu.memory_space<vmem>>, vector<1x256x128xbf16>,
    } else {
    }
    %c2_i32_19 = arith.constant 2 : i32
    %41 = arith.cmpi eq, %arg0, %c2_i32_19 : i32
    %c0_i32_20 = arith.constant 0 : i32
    %42 = arith.cmpi eq, %arg1, %c0_i32_20 : i32
    %43 = arith.andi %41, %42 : i1
    %44 = arith.extui %43 : i1 to i32
    %c0_i32_21 = arith.constant 0 : i32
    %45 = arith.cmpi ne, %44, %c0_i32_21 : i32
    scf.if %45 {
      %c1 = arith.constant 1 : index
      %c0_22 = arith.constant 0 : index
      %c0_23 = arith.constant 0 : index
      %46 = vector.load %arg10[%c1, %c0_22, %c0_23] : memref<2x256x128xbf16, #tpu.memory_space<vmem>>, vector<1x256x128xbf16>
      %47 = vector.shape_cast %46 : vector<1x256x128xbf16> to vector<256x128xbf16>
      %c0_24 = arith.constant 0 : index
      %c0_25 = arith.constant 0 : index
      %48 = vector.load %arg6[%c0_24, %c0_25] : memref<8x256xbf16, #tpu.memory_space<vmem>>, vector<8x256xbf16>
      %cst_26 = arith.constant dense<0.000000e+00> : vector<8x128xf32>
      %49 = tpu.matmul %48, %47, %cst_26 {dimension_numbers = #tpu.dot_dimension_numbers<[1], [0], [0], [1], [0, 0, 1, 1], [], []>} : vector<8x256xbf16>, vector<256x128xbf16>, vector<8x128xf32> -> vector<8x128xf32>
      %50 = arith.truncf %49 : vector<8x128xf32> to vector<8x128xbf16>
      %c3 = arith.constant 3 : index
      %c0_27 = arith.constant 0 : index
      %c0_28 = arith.constant 0 : index
      %51 = vector.load %arg4[%c3, %c0_27, %c0_28] : memref<4x128x128xbf16, #tpu.memory_space<vmem>>, vector<1x128x128xbf16>
      %52 = vector.shape_cast %51 : vector<1x128x128xbf16> to vector<128x128xbf16>
      %cst_29 = arith.constant dense<0.000000e+00> : vector<8x128xf32>
      %53 = tpu.matmul %50, %52, %cst_29 {dimension_numbers = #tpu.dot_dimension_numbers<[1], [0], [0], [1], [0, 0, 1, 1], [], []>} : vector<8x128xbf16>, vector<128x128xbf16>, vector<8x128xf32> -> vector<8x128xf32>
      %c3_30 = arith.constant 3 : index
      %c0_31 = arith.constant 0 : index
      %c0_32 = arith.constant 0 : index
      %54 = vector.load %arg5[%c3_30, %c0_31, %c0_32] : memref<4x1x128xf32, #tpu.memory_space<vmem>>, vector<1x1x128xf32>
      %55 = vector.shape_cast %54 : vector<1x1x128xf32> to vector<1x128xf32>
      %56 = vector.broadcast %55 : vector<1x128xf32> to vector<8x128xf32>
      %57 = arith.addf %53, %56 : vector<8x128xf32>
      %58 = arith.truncf %57 : vector<8x128xf32> to vector<8x128xbf16>
      %c0_33 = arith.constant 0 : index
      %c0_34 = arith.constant 0 : index
      %59 = vector.load %arg7[%c0_33, %c0_34] : memref<128x128xbf16, #tpu.memory_space<vmem>>, vector<128x128xbf16>
      %cst_35 = arith.constant dense<0.000000e+00> : vector<8x128xf32>
      %60 = tpu.matmul %58, %59, %cst_35 {dimension_numbers = #tpu.dot_dimension_numbers<[1], [0], [0], [1], [0, 0, 1, 1], [], []>} : vector<8x128xbf16>, vector<128x128xbf16>, vector<8x128xf32> -> vector<8x128xf32>
      %c0_36 = arith.constant 0 : index
      %c0_37 = arith.constant 0 : index
      %61 = vector.load %arg8[%c0_36, %c0_37] : memref<1x128xf32, #tpu.memory_space<vmem>>, vector<1x128xf32>
      %62 = vector.broadcast %61 : vector<1x128xf32> to vector<8x128xf32>
      %63 = arith.addf %60, %62 : vector<8x128xf32>
      %c0_38 = arith.constant 0 : index
      %c0_39 = arith.constant 0 : index
      %64 = vector.load %arg9[%c0_38, %c0_39] : memref<8x128xf32, #tpu.memory_space<vmem>>, vector<8x128xf32>
      tpu.vector_store %arg9[%c0_38, %c0_39], %63 {strides = array<i32>} : memref<8x128xf32, #tpu.memory_space<vmem>>, vector<8x128xf32>,
    } else {
    }
    return
  }
  func.func @transform_0(%arg0: i32, %arg1: i32) -> (i32, i32) {
    %c0_i32 = arith.constant 0 : i32
    %c0_i32_0 = arith.constant 0 : i32
    return %arg1, %c0_i32 : i32, i32
  }
  func.func @transform_1(%arg0: i32, %arg1: i32) -> (i32, i32) {
    %c0_i32 = arith.constant 0 : i32
    %c0_i32_0 = arith.constant 0 : i32
    %c0_i32_1 = arith.constant 0 : i32
    return %c0_i32, %c0_i32_0 : i32, i32
  }
  func.func @transform_2(%arg0: i32, %arg1: i32) -> (i32, i32, i32) {
    %c0_i32 = arith.constant 0 : i32
    %c0_i32_0 = arith.constant 0 : i32
    %c0_i32_1 = arith.constant 0 : i32
    %c0_i32_2 = arith.constant 0 : i32
    return %c0_i32, %c0_i32_0, %c0_i32_1 : i32, i32, i32
  }
  func.func @transform_3(%arg0: i32, %arg1: i32) -> (i32, i32, i32) {
    %c0_i32 = arith.constant 0 : i32
    %c0_i32_0 = arith.constant 0 : i32
    %c0_i32_1 = arith.constant 0 : i32
    %c0_i32_2 = arith.constant 0 : i32
    return %c0_i32, %c0_i32_0, %c0_i32_1 : i32, i32, i32
  }
  func.func @transform_4(%arg0: i32, %arg1: i32) -> (i32, i32) {
    %c0_i32 = arith.constant 0 : i32
    %c0_i32_0 = arith.constant 0 : i32
    %c0_i32_1 = arith.constant 0 : i32
    return %c0_i32, %c0_i32_0 : i32, i32
  }
  func.func @transform_5(%arg0: i32, %arg1: i32) -> (i32, i32) {
    %c0_i32 = arith.constant 0 : i32
    %c0_i32_0 = arith.constant 0 : i32
    %c0_i32_1 = arith.constant 0 : i32
    return %c0_i32, %c0_i32_0 : i32, i32
  }
  func.func @transform_6(%arg0: i32, %arg1: i32) -> (i32, i32) {
    %c0_i32 = arith.constant 0 : i32
    %c0_i32_0 = arith.constant 0 : i32
    %c0_i32_1 = arith.constant 0 : i32
    return %c0_i32, %c0_i32_0 : i32, i32
  }
  func.func @transform_7(%arg0: i32, %arg1: i32) -> (i32, i32) {
    %c0_i32 = arith.constant 0 : i32
    %c0_i32_0 = arith.constant 0 : i32
    %c0_i32_1 = arith.constant 0 : i32
    return %c0_i32, %c0_i32_0 : i32, i32
  }
}

</mosaic_0001>

<llo_original>
// kernel: gcn_forward.1
$region0: #{gcn_forward.1}
  #allocation0 [shape = 'u32[]', space=smem, size = 0x4, offset = 0x4, fixed_abs, tag = 'smem constant byte address 0x4 - core index']
  #allocation1 [shape = 'u32[144,128]{1,0:T(1,128)}', space=vmem, size = 0x12000, scoped, tag = 'internal scratch']
  #allocation2 [shape = 'bf16[2,256,128]{2,1,0:T(16,128)(2,1)}', space=vmem, size = 0x20000, scoped, tag = 'scratch operand']
  %s0 = inlined_call_operand.vmem [shape: bf16[256,256], index: 0, kind: input, shape index: {}]
  %s1 = inlined_call_operand.vmem [shape: bf16[256,128], index: 1, kind: input, shape index: {}]
  %s2 = inlined_call_operand.vmem [shape: bf16[4,128,128], index: 2, kind: input, shape index: {}]
  %s3 = inlined_call_operand.vmem [shape: f32[4,1,128], index: 3, kind: input, shape index: {}]
  %s4 = inlined_call_operand.vmem [shape: bf16[8,256], index: 4, kind: input, shape index: {}]
  %s5 = inlined_call_operand.vmem [shape: bf16[128,128], index: 5, kind: input, shape index: {}]
  %s6 = inlined_call_operand.vmem [shape: f32[1,128], index: 6, kind: input, shape index: {}]
  %s7 = inlined_call_operand.vmem [shape: f32[8,128], index: 7, kind: output, shape index: {}]
  %s8 = sld [smem:[#allocation0]]
  $region77: #{gcn_forward.1} parent=0
    _
  %s10 = ssub.s32 1, %s8
  %s11 = scalar_select 0, %s10, %s8
  loop: start=0, step=1, limit=5
  $region2: #{gcn_forward.1} parent=0 // loop_pre_header
    _
  $region3: #{gcn_forward.1} parent=0 // loop_header
    %s13 = sphi 0, %s17
    %p14 = scmp.ge.s32.totalorder %s13, 5
    %s20 = sphi 0, %s32
    %s21 = sphi 0, %s28
    %s22 = sphi 0, %s20
    %s23 = sphi 0, %s21
    %s24 = sphi 0, %s22
    %s25 = sphi 0, %s23
    %s35 = sphi 0, %s37
    %s38 = sphi 0, %s35
    %s39 = sphi 0, %s38
    %s55 = sphi 0, %s39
    %s59 = sphi 0, %s59
    %s61 = sphi 0, %s59
    %s62 = sphi 0, %s61
    %s76 = sphi 0, %s62
    %s80 = sphi 0, %s80
    %s82 = sphi 0, %s80
    %s83 = sphi 0, %s82
    %s97 = sphi 0, %s83
    %s101 = sphi 0, %s101
    %s103 = sphi 0, %s101
    %s104 = sphi 0, %s103
    %s118 = sphi 0, %s104
    %s122 = sphi 0, %s122
    %s124 = sphi 0, %s122
    %s125 = sphi 0, %s124
    %s139 = sphi 0, %s125
    %s143 = sphi 0, %s143
    %s145 = sphi 0, %s143
    %s146 = sphi 0, %s145
    %s160 = sphi 0, %s146
    %s164 = sphi 0, %s164
    %s166 = sphi 0, %s164
    %s167 = sphi 0, %s166
    %s181 = sphi 0, %s167
    %s185 = sphi 0, %s185
    %s187 = sphi 0, %s185
    %s188 = sphi 0, %s187
    %s202 = sphi 0, %s188
  $region4: #{gcn_forward.1} parent=0 // loop_header_branch
    %16 = sbr.rel (%p14) target = $region8
  $region5: #{gcn_forward.1} parent=0 // loop_body
    %s18 = ssub.s32 %s13, 1
    %s19 = ssub.s32 %s13, 2
    %s26 = sadd.s32 1, %s21
    %p27 = scmp.ge.s32.totalorder %s26, 1
    %s28 = scalar_select %p27, 0, %s26
    %s29 = sadd.s32 1, %s20
    %s30 = scalar_select %p27, %s29, %s20
    %p31 = scmp.ge.s32.totalorder %s30, 3
    %s32 = scalar_select %p31, 0, %s30
    %s33 = ssub.s32 %s21, %s28
    %p34 = scmp.eq.s32.totalorder %s33, 0
    %s36 = sadd.s32 %s35, 1
    %s37 = scalar_select %p34, %s35, %s36
    %p40 = pneg %p34
    %p41 = scmp.eq.s32.totalorder %s13, 2
    %p42 = por %p40, %p41
    %p43 = scmp.ne.s32.totalorder %s35, %s38
    %p44 = scmp.eq.s32.totalorder %s13, 0
    %p45 = por %p43, %p44
    %p46 = scmp.ne.s32.totalorder %s35, %s38
    %p47 = scmp.eq.s32.totalorder %s18, 2
    %p48 = por %p46, %p47
    %p49 = scmp.ne.s32.totalorder %s38, %s39
    %p50 = scmp.eq.s32.totalorder %s18, 0
    %p51 = por %p49, %p50
    %p52 = scmp.ne.s32.totalorder %s38, %s39
    %p53 = scmp.eq.s32.totalorder %s19, 2
    %p54 = por %p52, %p53
    %p56 = scmp.ne.s32.totalorder %s39, %s55
    %p57 = scmp.eq.s32.totalorder %s19, 0
    %p58 = por %p56, %p57
    %s60 = sadd.s32 %s59, 1
    %p63 = scmp.eq.s32.totalorder %s13, 2
    %p64 = scmp.ne.s32.totalorder %s59, %s61
    %p65 = scmp.eq.s32.totalorder %s13, 0
    %p66 = por %p64, %p65
    %p67 = scmp.ne.s32.totalorder %s59, %s61
    %p68 = scmp.eq.s32.totalorder %s18, 2
    %p69 = por %p67, %p68
    %p70 = scmp.ne.s32.totalorder %s61, %s62
    %p71 = scmp.eq.s32.totalorder %s18, 0
    %p72 = por %p70, %p71
    %p73 = scmp.ne.s32.totalorder %s61, %s62
    %p74 = scmp.eq.s32.totalorder %s19, 2
    %p75 = por %p73, %p74
    %p77 = scmp.ne.s32.totalorder %s62, %s76
    %p78 = scmp.eq.s32.totalorder %s19, 0
    %p79 = por %p77, %p78
    %s81 = sadd.s32 %s80, 1
    %p84 = scmp.eq.s32.totalorder %s13, 2
    %p85 = scmp.ne.s32.totalorder %s80, %s82
    %p86 = scmp.eq.s32.totalorder %s13, 0
    %p87 = por %p85, %p86
    %p88 = scmp.ne.s32.totalorder %s80, %s82
    %p89 = scmp.eq.s32.totalorder %s18, 2
    %p90 = por %p88, %p89
    %p91 = scmp.ne.s32.totalorder %s82, %s83
    %p92 = scmp.eq.s32.totalorder %s18, 0
    %p93 = por %p91, %p92
    %p94 = scmp.ne.s32.totalorder %s82, %s83
    %p95 = scmp.eq.s32.totalorder %s19, 2
    %p96 = por %p94, %p95
    %p98 = scmp.ne.s32.totalorder %s83, %s97
    %p99 = scmp.eq.s32.totalorder %s19, 0
    %p100 = por %p98, %p99
    %s102 = sadd.s32 %s101, 1
    %p105 = scmp.eq.s32.totalorder %s13, 2
    %p106 = scmp.ne.s32.totalorder %s101, %s103
    %p107 = scmp.eq.s32.totalorder %s13, 0
    %p108 = por %p106, %p107
    %p109 = scmp.ne.s32.totalorder %s101, %s103
    %p110 = scmp.eq.s32.totalorder %s18, 2
    %p111 = por %p109, %p110
    %p112 = scmp.ne.s32.totalorder %s103, %s104
    %p113 = scmp.eq.s32.totalorder %s18, 0
    %p114 = por %p112, %p113
    %p115 = scmp.ne.s32.totalorder %s103, %s104
    %p116 = scmp.eq.s32.totalorder %s19, 2
    %p117 = por %p115, %p116
    %p119 = scmp.ne.s32.totalorder %s104, %s118
    %p120 = scmp.eq.s32.totalorder %s19, 0
    %p121 = por %p119, %p120
    %s123 = sadd.s32 %s122, 1
    %p126 = scmp.eq.s32.totalorder %s13, 2
    %p127 = scmp.ne.s32.totalorder %s122, %s124
    %p128 = scmp.eq.s32.totalorder %s13, 0
    %p129 = por %p127, %p128
    %p130 = scmp.ne.s32.totalorder %s122, %s124
    %p131 = scmp.eq.s32.totalorder %s18, 2
    %p132 = por %p130, %p131
    %p133 = scmp.ne.s32.totalorder %s124, %s125
    %p134 = scmp.eq.s32.totalorder %s18, 0
    %p135 = por %p133, %p134
    %p136 = scmp.ne.s32.totalorder %s124, %s125
    %p137 = scmp.eq.s32.totalorder %s19, 2
    %p138 = por %p136, %p137
    %p140 = scmp.ne.s32.totalorder %s125, %s139
    %p141 = scmp.eq.s32.totalorder %s19, 0
    %p142 = por %p140, %p141
    %s144 = sadd.s32 %s143, 1
    %p147 = scmp.eq.s32.totalorder %s13, 2
    %p148 = scmp.ne.s32.totalorder %s143, %s145
    %p149 = scmp.eq.s32.totalorder %s13, 0
    %p150 = por %p148, %p149
    %p151 = scmp.ne.s32.totalorder %s143, %s145
    %p152 = scmp.eq.s32.totalorder %s18, 2
    %p153 = por %p151, %p152
    %p154 = scmp.ne.s32.totalorder %s145, %s146
    %p155 = scmp.eq.s32.totalorder %s18, 0
    %p156 = por %p154, %p155
    %p157 = scmp.ne.s32.totalorder %s145, %s146
    %p158 = scmp.eq.s32.totalorder %s19, 2
    %p159 = por %p157, %p158
    %p161 = scmp.ne.s32.totalorder %s146, %s160
    %p162 = scmp.eq.s32.totalorder %s19, 0
    %p163 = por %p161, %p162
    %s165 = sadd.s32 %s164, 1
    %p168 = scmp.eq.s32.totalorder %s13, 2
    %p169 = scmp.ne.s32.totalorder %s164, %s166
    %p170 = scmp.eq.s32.totalorder %s13, 0
    %p171 = por %p169, %p170
    %p172 = scmp.ne.s32.totalorder %s164, %s166
    %p173 = scmp.eq.s32.totalorder %s18, 2
    %p174 = por %p172, %p173
    %p175 = scmp.ne.s32.totalorder %s166, %s167
    %p176 = scmp.eq.s32.totalorder %s18, 0
    %p177 = por %p175, %p176
    %p178 = scmp.ne.s32.totalorder %s166, %s167
    %p179 = scmp.eq.s32.totalorder %s19, 2
    %p180 = por %p178, %p179
    %p182 = scmp.ne.s32.totalorder %s167, %s181
    %p183 = scmp.eq.s32.totalorder %s19, 0
    %p184 = por %p182, %p183
    %s186 = sadd.s32 %s185, 1
    %p189 = scmp.eq.s32.totalorder %s13, 2
    %p190 = scmp.ne.s32.totalorder %s185, %s187
    %p191 = scmp.eq.s32.totalorder %s13, 0
    %p192 = por %p190, %p191
    %p193 = scmp.ne.s32.totalorder %s185, %s187
    %p194 = scmp.eq.s32.totalorder %s18, 2
    %p195 = por %p193, %p194
    %p196 = scmp.ne.s32.totalorder %s187, %s188
    %p197 = scmp.eq.s32.totalorder %s18, 0
    %p198 = por %p196, %p197
    %p199 = scmp.ne.s32.totalorder %s187, %s188
    %p200 = scmp.eq.s32.totalorder %s19, 2
    %p201 = por %p199, %p200
    %p203 = scmp.ne.s32.totalorder %s188, %s202
    %p204 = scmp.eq.s32.totalorder %s19, 0
    %p205 = por %p203, %p204
    %p206 = scmp.le.s32.totalorder 1, %s13
    %p207 = scmp.lt.s32.totalorder %s13, 4
    %p208 = pnand %p206, %p207
    %p209 = pneg %p208
    // Predicated region
    $region9: #{gcn_forward.1} parent=5 // pred_check
      _
    $region10: #{gcn_forward.1} parent=5 // pred_check_branch
      %211 = sbr.rel (%p208) target = $region12
    $region11: #{gcn_forward.1} parent=5 // pred_region
      %s212 = ssub.s32 %s13, 1
      // Predicated region
      $region13: #{gcn_forward.1} parent=11 // pred_check
        %p213 = pneg %p51
      $region14: #{gcn_forward.1} parent=11 // pred_check_branch
        %215 = sbr.rel (%p213) target = $region16
      $region15: #{gcn_forward.1} parent=11 // pred_region
        %s216 = smul.u32 32, %s23
        %p217 = scmp.lt.s32.totalorder %s216, 31
        %s218 = scalar_select %p217, %s216, 31
        %s219 = smul.addr %s218, 2
        %s220 = smul.addr %s219, 4
        %s221 = scalar_lea.vmem %s0, %s220
        %s222 = smul.u32 32, %s23
      $region16: #{gcn_forward.1} parent=11 // pred_fallthru
        _
      // Predicated region
      $region17: #{gcn_forward.1} parent=11 // pred_check
        %p223 = pneg %p72
      $region18: #{gcn_forward.1} parent=11 // pred_check_branch
        %225 = sbr.rel (%p223) target = $region20
      $region19: #{gcn_forward.1} parent=11 // pred_region
        _
      $region20: #{gcn_forward.1} parent=11 // pred_fallthru
        _
      // Predicated region
      $region21: #{gcn_forward.1} parent=11 // pred_check
        %p226 = pneg %p93
      $region22: #{gcn_forward.1} parent=11 // pred_check_branch
        %228 = sbr.rel (%p226) target = $region24
      $region23: #{gcn_forward.1} parent=11 // pred_region
        _
      $region24: #{gcn_forward.1} parent=11 // pred_fallthru
        _
      // Predicated region
      $region25: #{gcn_forward.1} parent=11 // pred_check
        %p229 = pneg %p114
      $region26: #{gcn_forward.1} parent=11 // pred_check_branch
        %231 = sbr.rel (%p229) target = $region28
      $region27: #{gcn_forward.1} parent=11 // pred_region
        _
      $region28: #{gcn_forward.1} parent=11 // pred_fallthru
        _
      // Predicated region
      $region29: #{gcn_forward.1} parent=11 // pred_check
        %p232 = pneg %p135
      $region30: #{gcn_forward.1} parent=11 // pred_check_branch
        %234 = sbr.rel (%p232) target = $region32
      $region31: #{gcn_forward.1} parent=11 // pred_region
        _
      $region32: #{gcn_forward.1} parent=11 // pred_fallthru
        _
      // Predicated region
      $region33: #{gcn_forward.1} parent=11 // pred_check
        %p235 = pneg %p156
      $region34: #{gcn_forward.1} parent=11 // pred_check_branch
        %237 = sbr.rel (%p235) target = $region36
      $region35: #{gcn_forward.1} parent=11 // pred_region
        _
      $region36: #{gcn_forward.1} parent=11 // pred_fallthru
        _
      // Predicated region
      $region37: #{gcn_forward.1} parent=11 // pred_check
        %p238 = pneg %p177
      $region38: #{gcn_forward.1} parent=11 // pred_check_branch
        %240 = sbr.rel (%p238) target = $region40
      $region39: #{gcn_forward.1} parent=11 // pred_region
        _
      $region40: #{gcn_forward.1} parent=11 // pred_fallthru
        _
    $region12: #{gcn_forward.1} parent=5 // pred_fallthru
      _
    %p241 = scmp.lt.s32.totalorder %s13, 3
    // Predicated region
    $region41: #{gcn_forward.1} parent=5 // pred_check
      %p242 = pneg %p241
    $region42: #{gcn_forward.1} parent=5 // pred_check_branch
      %244 = sbr.rel (%p242) target = $region44
    $region43: #{gcn_forward.1} parent=5 // pred_region
      _
    $region44: #{gcn_forward.1} parent=5 // pred_fallthru
      _
    %p245 = scmp.le.s32.totalorder 1, %s13
    %p246 = scmp.lt.s32.totalorder %s13, 4
    %p247 = pnand %p245, %p246
    %p248 = pneg %p247
    // Predicated region
    $region45: #{gcn_forward.1} parent=5 // pred_check
      _
    $region46: #{gcn_forward.1} parent=5 // pred_check_branch
      %250 = sbr.rel (%p247) target = $region48
    $region47: #{gcn_forward.1} parent=5 // pred_region
      %s251 = ssub.s32 %s13, 1
      %s252 = smul.u32 32, %s23
      %p253 = scmp.lt.s32.totalorder %s252, 31
      %s254 = scalar_select %p253, %s252, 31
      %s255 = smul.addr %s254, 2
      %s256 = smul.addr %s255, 4
      %s257 = scalar_lea.vmem %s0, %s256
      %p258 = pneg %p51
      %p259 = pneg %p48
      %p260 = pneg %p72
      %p261 = pneg %p69
      %p262 = pneg %p93
      %p263 = pneg %p90
      %p264 = pneg %p114
      %p265 = pneg %p111
      %p266 = pneg %p135
      %p267 = pneg %p132
      %p268 = pneg %p156
      %p269 = pneg %p153
      %p270 = pneg %p177
      %p271 = pneg %p174
      %p272 = pneg %p198
      %p273 = pneg %p195
      %s274 = smul.u32 32, %s23
      %p275 = scmp.lt.s32.totalorder %s274, 31
      %s276 = scalar_select %p275, %s274, 31
      %s277 = smul.addr %s276, 2
      %s278 = smul.addr %s277, 4
      %s279 = scalar_lea.vmem %s0, %s278
      %s280 = smul.u32 32, %s23
      %p282 = scmp.eq.s32.totalorder %s22, 0
      %p283 = scmp.eq.s32.totalorder %s23, 0
      %p284 = pnand %p282, %p283
      %p285 = pneg %p284
      // Predicated region
      $region49: #{gcn_forward.1} parent=47 // pred_check
        _
      $region50: #{gcn_forward.1} parent=47 // pred_check_branch
        %287 = sbr.rel (%p284) target = $region52
      $region51: #{gcn_forward.1} parent=47 // pred_region
        %v288 = vld [vmem:[%s1] sm:$0xf]
        %v289 = vld [vmem:[%s1 + $0x4] sm:$0xf]
        %v290 = vld [vmem:[%s1 + $0x8] sm:$0xf]
        %v291 = vld [vmem:[%s1 + $0xc] sm:$0xf]
        %v292 = vld [vmem:[%s1 + $0x10] sm:$0xf]
        %v293 = vld [vmem:[%s1 + $0x14] sm:$0xf]
        %v294 = vld [vmem:[%s1 + $0x18] sm:$0xf]
        %v295 = vld [vmem:[%s1 + $0x1c] sm:$0xf]
        %v296 = vld [vmem:[%s1 + $0x20] sm:$0xf]
        %v297 = vld [vmem:[%s1 + $0x24] sm:$0xf]
        %v298 = vld [vmem:[%s1 + $0x28] sm:$0xf]
        %v299 = vld [vmem:[%s1 + $0x2c] sm:$0xf]
        %v300 = vld [vmem:[%s1 + $0x30] sm:$0xf]
        %v301 = vld [vmem:[%s1 + $0x34] sm:$0xf]
        %v302 = vld [vmem:[%s1 + $0x38] sm:$0xf]
        %v303 = vld [vmem:[%s1 + $0x3c] sm:$0xf]
        %v304 = vld [vmem:[%s1 + $0x40] sm:$0xf]
        %v305 = vld [vmem:[%s1 + $0x44] sm:$0xf]
        %v306 = vld [vmem:[%s1 + $0x48] sm:$0xf]
        %v307 = vld [vmem:[%s1 + $0x4c] sm:$0xf]
        %v308 = vld [vmem:[%s1 + $0x50] sm:$0xf]
        %v309 = vld [vmem:[%s1 + $0x54] sm:$0xf]
        %v310 = vld [vmem:[%s1 + $0x58] sm:$0xf]
        %v311 = vld [vmem:[%s1 + $0x5c] sm:$0xf]
        %v312 = vld [vmem:[%s1 + $0x60] sm:$0xf]
        %v313 = vld [vmem:[%s1 + $0x64] sm:$0xf]
        %v314 = vld [vmem:[%s1 + $0x68] sm:$0xf]
        %v315 = vld [vmem:[%s1 + $0x6c] sm:$0xf]
        %v316 = vld [vmem:[%s1 + $0x70] sm:$0xf]
        %v317 = vld [vmem:[%s1 + $0x74] sm:$0xf]
        %v318 = vld [vmem:[%s1 + $0x78] sm:$0xf]
        %v319 = vld [vmem:[%s1 + $0x7c] sm:$0xf]
        %v352 = vunpack.c.l.b16 %v288
        %v353 = vunpack.c.l.b16 %v289
        %v354 = vunpack.c.l.b16 %v290
        %v355 = vunpack.c.l.b16 %v291
        %v356 = vunpack.c.l.b16 %v292
        %v357 = vunpack.c.l.b16 %v293
        %v358 = vunpack.c.l.b16 %v294
        %v359 = vunpack.c.l.b16 %v295
        %v360 = vunpack.c.l.b16 %v296
        %v361 = vunpack.c.l.b16 %v297
        %v362 = vunpack.c.l.b16 %v298
        %v363 = vunpack.c.l.b16 %v299
        %v364 = vunpack.c.l.b16 %v300
        %v365 = vunpack.c.l.b16 %v301
        %v366 = vunpack.c.l.b16 %v302
        %v367 = vunpack.c.l.b16 %v303
        %v368 = vunpack.c.l.b16 %v304
        %v369 = vunpack.c.l.b16 %v305
        %v370 = vunpack.c.l.b16 %v306
        %v371 = vunpack.c.l.b16 %v307
        %v372 = vunpack.c.l.b16 %v308
        %v373 = vunpack.c.l.b16 %v309
        %v374 = vunpack.c.l.b16 %v310
        %v375 = vunpack.c.l.b16 %v311
        %v376 = vunpack.c.l.b16 %v312
        %v377 = vunpack.c.l.b16 %v313
        %v378 = vunpack.c.l.b16 %v314
        %v379 = vunpack.c.l.b16 %v315
        %v380 = vunpack.c.l.b16 %v316
        %v381 = vunpack.c.l.b16 %v317
        %v382 = vunpack.c.l.b16 %v318
        %v383 = vunpack.c.l.b16 %v319
        %v384 = vpack.c.b16 %v353, %v352
        %v385 = vpack.c.b16 %v355, %v354
        %v386 = vpack.c.b16 %v357, %v356
        %v387 = vpack.c.b16 %v359, %v358
        %v388 = vpack.c.b16 %v361, %v360
        %v389 = vpack.c.b16 %v363, %v362
        %v390 = vpack.c.b16 %v365, %v364
        %v391 = vpack.c.b16 %v367, %v366
        %v392 = vpack.c.b16 %v369, %v368
        %v393 = vpack.c.b16 %v371, %v370
        %v394 = vpack.c.b16 %v373, %v372
        %v395 = vpack.c.b16 %v375, %v374
        %v396 = vpack.c.b16 %v377, %v376
        %v397 = vpack.c.b16 %v379, %v378
        %v398 = vpack.c.b16 %v381, %v380
        %v399 = vpack.c.b16 %v383, %v382
        %416 = vst [vmem:[#allocation2] sm:$0xff] %v384
        %417 = vst [vmem:[#allocation2 + $0x8] sm:$0xff] %v385
        %418 = vst [vmem:[#allocation2 + $0x10] sm:$0xff] %v386
        %419 = vst [vmem:[#allocation2 + $0x18] sm:$0xff] %v387
        %420 = vst [vmem:[#allocation2 + $0x20] sm:$0xff] %v388
        %421 = vst [vmem:[#allocation2 + $0x28] sm:$0xff] %v389
        %422 = vst [vmem:[#allocation2 + $0x30] sm:$0xff] %v390
        %423 = vst [vmem:[#allocation2 + $0x38] sm:$0xff] %v391
        %424 = vst [vmem:[#allocation2 + $0x40] sm:$0xff] %v392
        %425 = vst [vmem:[#allocation2 + $0x48] sm:$0xff] %v393
        %426 = vst [vmem:[#allocation2 + $0x50] sm:$0xff] %v394
        %427 = vst [vmem:[#allocation2 + $0x58] sm:$0xff] %v395
        %428 = vst [vmem:[#allocation2 + $0x60] sm:$0xff] %v396
        %429 = vst [vmem:[#allocation2 + $0x68] sm:$0xff] %v397
        %430 = vst [vmem:[#allocation2 + $0x70] sm:$0xff] %v398
        %431 = vst [vmem:[#allocation2 + $0x78] sm:$0xff] %v399
      $region52: #{gcn_forward.1} parent=47 // pred_fallthru
        _
      %p432 = scmp.lt.s32.totalorder %s22, 0
      %s433 = ssub.s32 0, %s22
      %s434 = scalar_select %p432, %s433, %s22
      %s435 = sand.u32 %s434, 1
      %s436 = ssub.s32 0, %s435
      %s437 = scalar_select %p432, %s436, %s435
      %p438 = scmp.ne.s32.totalorder %s437, 0
      %p439 = scmp.lt.s32.totalorder %s437, 0
      %p440 = pnand %p439, %p438
      %p441 = pneg %p440
      %s442 = sadd.s32 %s437, 2
      %s443 = scalar_select %p441, %s442, %s437
      %s444 = smul.u32 %s23, 256
      %v445 = vld [vmem:[%s279] sm:$0xff]
      %v446 = vld [vmem:[%s279 + $0x8] sm:$0xff]
      %v447 = vld [vmem:[%s279 + $0x10] sm:$0xff]
      %v448 = vld [vmem:[%s279 + $0x18] sm:$0xff]
      %v449 = vld [vmem:[%s279 + $0x20] sm:$0xff]
      %v450 = vld [vmem:[%s279 + $0x28] sm:$0xff]
      %v451 = vld [vmem:[%s279 + $0x30] sm:$0xff]
      %v452 = vld [vmem:[%s279 + $0x38] sm:$0xff]
      %v453 = vld [vmem:[%s279 + $0x40] sm:$0xff]
      %v454 = vld [vmem:[%s279 + $0x48] sm:$0xff]
      %v455 = vld [vmem:[%s279 + $0x50] sm:$0xff]
      %v456 = vld [vmem:[%s279 + $0x58] sm:$0xff]
      %v457 = vld [vmem:[%s279 + $0x60] sm:$0xff]
      %v458 = vld [vmem:[%s279 + $0x68] sm:$0xff]
      %v459 = vld [vmem:[%s279 + $0x70] sm:$0xff]
      %v460 = vld [vmem:[%s279 + $0x78] sm:$0xff]
      %v461 = vld [vmem:[%s279 + $0x80] sm:$0xff]
      %v462 = vld [vmem:[%s279 + $0x88] sm:$0xff]
      %v463 = vld [vmem:[%s279 + $0x90] sm:$0xff]
      %v464 = vld [vmem:[%s279 + $0x98] sm:$0xff]
      %v465 = vld [vmem:[%s279 + $0xa0] sm:$0xff]
      %v466 = vld [vmem:[%s279 + $0xa8] sm:$0xff]
      %v467 = vld [vmem:[%s279 + $0xb0] sm:$0xff]
      %v468 = vld [vmem:[%s279 + $0xb8] sm:$0xff]
      %v469 = vld [vmem:[%s279 + $0xc0] sm:$0xff]
      %v470 = vld [vmem:[%s279 + $0xc8] sm:$0xff]
      %v471 = vld [vmem:[%s279 + $0xd0] sm:$0xff]
      %v472 = vld [vmem:[%s279 + $0xd8] sm:$0xff]
      %v473 = vld [vmem:[%s279 + $0xe0] sm:$0xff]
      %v474 = vld [vmem:[%s279 + $0xe8] sm:$0xff]
      %v475 = vld [vmem:[%s279 + $0xf0] sm:$0xff]
      %v476 = vld [vmem:[%s279 + $0xf8] sm:$0xff]
      %s477 = smul.u32 %s443, 16
      %s478 = smul.addr %s477, 8
      %s479 = scalar_lea.vmem [#allocation2], %s478
      %v480 = vld [vmem:[%s479] sm:$0xff]
      %v481 = vld [vmem:[%s479 + $0x8] sm:$0xff]
      %v482 = vld [vmem:[%s479 + $0x10] sm:$0xff]
      %v483 = vld [vmem:[%s479 + $0x18] sm:$0xff]
      %v484 = vld [vmem:[%s479 + $0x20] sm:$0xff]
      %v485 = vld [vmem:[%s479 + $0x28] sm:$0xff]
      %v486 = vld [vmem:[%s479 + $0x30] sm:$0xff]
      %v487 = vld [vmem:[%s479 + $0x38] sm:$0xff]
      %v488 = vld [vmem:[%s479 + $0x40] sm:$0xff]
      %v489 = vld [vmem:[%s479 + $0x48] sm:$0xff]
      %v490 = vld [vmem:[%s479 + $0x50] sm:$0xff]
      %v491 = vld [vmem:[%s479 + $0x58] sm:$0xff]
      %v492 = vld [vmem:[%s479 + $0x60] sm:$0xff]
      %v493 = vld [vmem:[%s479 + $0x68] sm:$0xff]
      %v494 = vld [vmem:[%s479 + $0x70] sm:$0xff]
      %v495 = vld [vmem:[%s479 + $0x78] sm:$0xff]
      %v528 = vunpack.c.l.b16 %v445
      %v529 = vunpack.c.h.b16 %v445
      %v530 = vunpack.c.l.b16 %v446
      %v531 = vunpack.c.h.b16 %v446
      %v532 = vunpack.c.l.b16 %v447
      %v533 = vunpack.c.h.b16 %v447
      %v534 = vunpack.c.l.b16 %v448
      %v535 = vunpack.c.h.b16 %v448
      %v536 = vunpack.c.l.b16 %v449
      %v537 = vunpack.c.h.b16 %v449
      %v538 = vunpack.c.l.b16 %v450
      %v539 = vunpack.c.h.b16 %v450
      %v540 = vunpack.c.l.b16 %v451
      %v541 = vunpack.c.h.b16 %v451
      %v542 = vunpack.c.l.b16 %v452
      %v543 = vunpack.c.h.b16 %v452
      %v544 = vunpack.c.l.b16 %v453
      %v545 = vunpack.c.h.b16 %v453
      %v546 = vunpack.c.l.b16 %v454
      %v547 = vunpack.c.h.b16 %v454
      %v548 = vunpack.c.l.b16 %v455
      %v549 = vunpack.c.h.b16 %v455
      %v550 = vunpack.c.l.b16 %v456
      %v551 = vunpack.c.h.b16 %v456
      %v552 = vunpack.c.l.b16 %v457
      %v553 = vunpack.c.h.b16 %v457
      %v554 = vunpack.c.l.b16 %v458
      %v555 = vunpack.c.h.b16 %v458
      %v556 = vunpack.c.l.b16 %v459
      %v557 = vunpack.c.h.b16 %v459
      %v558 = vunpack.c.l.b16 %v460
      %v559 = vunpack.c.h.b16 %v460
      %v560 = vunpack.c.l.b16 %v461
      %v561 = vunpack.c.h.b16 %v461
      %v562 = vunpack.c.l.b16 %v462
      %v563 = vunpack.c.h.b16 %v462
      %v564 = vunpack.c.l.b16 %v463
      %v565 = vunpack.c.h.b16 %v463
      %v566 = vunpack.c.l.b16 %v464
      %v567 = vunpack.c.h.b16 %v464
      %v568 = vunpack.c.l.b16 %v465
      %v569 = vunpack.c.h.b16 %v465
      %v570 = vunpack.c.l.b16 %v466
      %v571 = vunpack.c.h.b16 %v466
      %v572 = vunpack.c.l.b16 %v467
      %v573 = vunpack.c.h.b16 %v467
      %v574 = vunpack.c.l.b16 %v468
      %v575 = vunpack.c.h.b16 %v468
      %v576 = vunpack.c.l.b16 %v469
      %v577 = vunpack.c.h.b16 %v469
      %v578 = vunpack.c.l.b16 %v470
      %v579 = vunpack.c.h.b16 %v470
      %v580 = vunpack.c.l.b16 %v471
      %v581 = vunpack.c.h.b16 %v471
      %v582 = vunpack.c.l.b16 %v472
      %v583 = vunpack.c.h.b16 %v472
      %v584 = vunpack.c.l.b16 %v473
      %v585 = vunpack.c.h.b16 %v473
      %v586 = vunpack.c.l.b16 %v474
      %v587 = vunpack.c.h.b16 %v474
      %v588 = vunpack.c.l.b16 %v475
      %v589 = vunpack.c.h.b16 %v475
      %v590 = vunpack.c.l.b16 %v476
      %v591 = vunpack.c.h.b16 %v476
      %v592 = vpack.c.b16 %v530, %v528
      %v593 = vpack.c.b16 %v531, %v529
      %v594 = vpack.c.b16 %v534, %v532
      %v595 = vpack.c.b16 %v535, %v533
      %v596 = vpack.c.b16 %v538, %v536
      %v597 = vpack.c.b16 %v539, %v537
      %v598 = vpack.c.b16 %v542, %v540
      %v599 = vpack.c.b16 %v543, %v541
      %v600 = vpack.c.b16 %v546, %v544
      %v601 = vpack.c.b16 %v547, %v545
      %v602 = vpack.c.b16 %v550, %v548
      %v603 = vpack.c.b16 %v551, %v549
      %v604 = vpack.c.b16 %v554, %v552
      %v605 = vpack.c.b16 %v555, %v553
      %v606 = vpack.c.b16 %v558, %v556
      %v607 = vpack.c.b16 %v559, %v557
      %v608 = vpack.c.b16 %v562, %v560
      %v609 = vpack.c.b16 %v563, %v561
      %v610 = vpack.c.b16 %v566, %v564
      %v611 = vpack.c.b16 %v567, %v565
      %v612 = vpack.c.b16 %v570, %v568
      %v613 = vpack.c.b16 %v571, %v569
      %v614 = vpack.c.b16 %v574, %v572
      %v615 = vpack.c.b16 %v575, %v573
      %v616 = vpack.c.b16 %v578, %v576
      %v617 = vpack.c.b16 %v579, %v577
      %v618 = vpack.c.b16 %v582, %v580
      %v619 = vpack.c.b16 %v583, %v581
      %v620 = vpack.c.b16 %v586, %v584
      %v621 = vpack.c.b16 %v587, %v585
      %v622 = vpack.c.b16 %v590, %v588
      %v623 = vpack.c.b16 %v591, %v589
      %656 = vmatprep.subr.bf16.mxu0 0
      %657 = vmatpush1.bf16.msra.mxu0 %v480
      %658 = vmatprep.subr.bf16.mxu0 0
      %659 = vmatpush1.bf16.msra.mxu0 %v481
      %660 = vmatprep.subr.bf16.mxu0 0
      %661 = vmatpush1.bf16.msra.mxu0 %v482
      %662 = vmatprep.subr.bf16.mxu0 0
      %663 = vmatpush1.bf16.msra.mxu0 %v483
      %664 = vmatprep.subr.bf16.mxu0 0
      %665 = vmatpush1.bf16.msra.mxu0 %v484
      %666 = vmatprep.subr.bf16.mxu0 0
      %667 = vmatpush1.bf16.msra.mxu0 %v485
      %668 = vmatprep.subr.bf16.mxu0 0
      %669 = vmatpush1.bf16.msra.mxu0 %v486
      %670 = vmatprep.subr.bf16.mxu0 0
      %671 = vmatpush1.bf16.msra.mxu0 %v487
      %672 = vmatprep.subr.bf16.mxu0 0
      %673 = vmatpush1.bf16.msra.mxu0 %v488
      %674 = vmatprep.subr.bf16.mxu0 0
      %675 = vmatpush1.bf16.msra.mxu0 %v489
      %676 = vmatprep.subr.bf16.mxu0 0
      %677 = vmatpush1.bf16.msra.mxu0 %v490
      %678 = vmatprep.subr.bf16.mxu0 0
      %679 = vmatpush1.bf16.msra.mxu0 %v491
      %680 = vmatprep.subr.bf16.mxu0 0
      %681 = vmatpush1.bf16.msra.mxu0 %v492
      %682 = vmatprep.subr.bf16.mxu0 0
      %683 = vmatpush1.bf16.msra.mxu0 %v493
      %684 = vmatprep.subr.bf16.mxu0 0
      %685 = vmatpush1.bf16.msra.mxu0 %v494
      %686 = vmatprep.subr.bf16.mxu0 0
      %687 = vmatpush1.bf16.msra.mxu0 %v495
      %688 = vmatprep.mubr.bf16.mxu0 %v593
      %689 = vmatmul.mubr.bf16.gmra.mrb[0].mxu0 %v592
      %v690 = vpop.f32.mrb[0].mxu0
      %v691 = vadd.f32 0.0, %v690
      %v692 = vpop.f32.mrb[0].mxu0
      %v693 = vpop.f32.mrb[0].mxu0
      %v694 = vadd.f32 0.0, %v693
      %v695 = vpop.f32.mrb[0].mxu0
      %696 = vmatprep.mubr.bf16.mxu0 %v595
      %697 = vmatmul.mubr.bf16.gmra.mrb[0].mxu0 %v594
      %v698 = vpop.f32.mrb[0].mxu0
      %v699 = vadd.f32 0.0, %v698
      %v700 = vpop.f32.mrb[0].mxu0
      %v701 = vpop.f32.mrb[0].mxu0
      %v702 = vadd.f32 0.0, %v701
      %v703 = vpop.f32.mrb[0].mxu0
      %704 = vmatprep.mubr.bf16.mxu0 %v597
      %705 = vmatmul.mubr.bf16.gmra.mrb[0].mxu0 %v596
      %v706 = vpop.f32.mrb[0].mxu0
      %v707 = vadd.f32 0.0, %v706
      %v708 = vpop.f32.mrb[0].mxu0
      %v709 = vpop.f32.mrb[0].mxu0
      %v710 = vadd.f32 0.0, %v709
      %v711 = vpop.f32.mrb[0].mxu0
      %712 = vmatprep.mubr.bf16.mxu0 %v599
      %713 = vmatmul.mubr.bf16.gmra.mrb[0].mxu0 %v598
      %v714 = vpop.f32.mrb[0].mxu0
      %v715 = vadd.f32 0.0, %v714
      %v716 = vpop.f32.mrb[0].mxu0
      %v717 = vpop.f32.mrb[0].mxu0
      %v718 = vadd.f32 0.0, %v717
      %v719 = vpop.f32.mrb[0].mxu0
      %720 = vmatprep.mubr.bf16.mxu0 %v601
      %721 = vmatmul.mubr.bf16.gmra.mrb[0].mxu0 %v600
      %v722 = vpop.f32.mrb[0].mxu0
      %v723 = vadd.f32 0.0, %v722
      %v724 = vpop.f32.mrb[0].mxu0
      %v725 = vpop.f32.mrb[0].mxu0
      %v726 = vadd.f32 0.0, %v725
      %v727 = vpop.f32.mrb[0].mxu0
      %728 = vmatprep.mubr.bf16.mxu0 %v603
      %729 = vmatmul.mubr.bf16.gmra.mrb[0].mxu0 %v602
      %v730 = vpop.f32.mrb[0].mxu0
      %v731 = vadd.f32 0.0, %v730
      %v732 = vpop.f32.mrb[0].mxu0
      %v733 = vpop.f32.mrb[0].mxu0
      %v734 = vadd.f32 0.0, %v733
      %v735 = vpop.f32.mrb[0].mxu0
      %736 = vmatprep.mubr.bf16.mxu0 %v605
      %737 = vmatmul.mubr.bf16.gmra.mrb[0].mxu0 %v604
      %v738 = vpop.f32.mrb[0].mxu0
      %v739 = vadd.f32 0.0, %v738
      %v740 = vpop.f32.mrb[0].mxu0
      %v741 = vpop.f32.mrb[0].mxu0
      %v742 = vadd.f32 0.0, %v741
      %v743 = vpop.f32.mrb[0].mxu0
      %744 = vmatprep.mubr.bf16.mxu0 %v607
      %745 = vmatmul.mubr.bf16.gmra.mrb[0].mxu0 %v606
      %v746 = vpop.f32.mrb[0].mxu0
      %v747 = vadd.f32 0.0, %v746
      %v748 = vpop.f32.mrb[0].mxu0
      %v749 = vpop.f32.mrb[0].mxu0
      %v750 = vadd.f32 0.0, %v749
      %v751 = vpop.f32.mrb[0].mxu0
      %752 = vmatprep.mubr.bf16.mxu0 %v609
      %753 = vmatmul.mubr.bf16.gmra.mrb[0].mxu0 %v608
      %v754 = vpop.f32.mrb[0].mxu0
      %v755 = vadd.f32 0.0, %v754
      %v756 = vpop.f32.mrb[0].mxu0
      %v757 = vpop.f32.mrb[0].mxu0
      %v758 = vadd.f32 0.0, %v757
      %v759 = vpop.f32.mrb[0].mxu0
      %760 = vmatprep.mubr.bf16.mxu0 %v611
      %761 = vmatmul.mubr.bf16.gmra.mrb[0].mxu0 %v610
      %v762 = vpop.f32.mrb[0].mxu0
      %v763 = vadd.f32 0.0, %v762
      %v764 = vpop.f32.mrb[0].mxu0
      %v765 = vpop.f32.mrb[0].mxu0
      %v766 = vadd.f32 0.0, %v765
      %v767 = vpop.f32.mrb[0].mxu0
      %768 = vmatprep.mubr.bf16.mxu0 %v613
      %769 = vmatmul.mubr.bf16.gmra.mrb[0].mxu0 %v612
      %v770 = vpop.f32.mrb[0].mxu0
      %v771 = vadd.f32 0.0, %v770
      %v772 = vpop.f32.mrb[0].mxu0
      %v773 = vpop.f32.mrb[0].mxu0
      %v774 = vadd.f32 0.0, %v773
      %v775 = vpop.f32.mrb[0].mxu0
      %776 = vmatprep.mubr.bf16.mxu0 %v615
      %777 = vmatmul.mubr.bf16.gmra.mrb[0].mxu0 %v614
      %v778 = vpop.f32.mrb[0].mxu0
      %v779 = vadd.f32 0.0, %v778
      %v780 = vpop.f32.mrb[0].mxu0
      %v781 = vpop.f32.mrb[0].mxu0
      %v782 = vadd.f32 0.0, %v781
      %v783 = vpop.f32.mrb[0].mxu0
      %784 = vmatprep.mubr.bf16.mxu0 %v617
      %785 = vmatmul.mubr.bf16.gmra.mrb[0].mxu0 %v616
      %v786 = vpop.f32.mrb[0].mxu0
      %v787 = vadd.f32 0.0, %v786
      %v788 = vpop.f32.mrb[0].mxu0
      %v789 = vpop.f32.mrb[0].mxu0
      %v790 = vadd.f32 0.0, %v789
      %v791 = vpop.f32.mrb[0].mxu0
      %792 = vmatprep.mubr.bf16.mxu0 %v619
      %793 = vmatmul.mubr.bf16.gmra.mrb[0].mxu0 %v618
      %v794 = vpop.f32.mrb[0].mxu0
      %v795 = vadd.f32 0.0, %v794
      %v796 = vpop.f32.mrb[0].mxu0
      %v797 = vpop.f32.mrb[0].mxu0
      %v798 = vadd.f32 0.0, %v797
      %v799 = vpop.f32.mrb[0].mxu0
      %800 = vmatprep.mubr.bf16.mxu0 %v621
      %801 = vmatmul.mubr.bf16.gmra.mrb[0].mxu0 %v620
      %v802 = vpop.f32.mrb[0].mxu0
      %v803 = vadd.f32 0.0, %v802
      %v804 = vpop.f32.mrb[0].mxu0
      %v805 = vpop.f32.mrb[0].mxu0
      %v806 = vadd.f32 0.0, %v805
      %v807 = vpop.f32.mrb[0].mxu0
      %808 = vmatprep.mubr.bf16.mxu0 %v623
      %809 = vmatmul.mubr.bf16.gmra.mrb[0].mxu0 %v622
      %v810 = vpop.f32.mrb[0].mxu0
      %v811 = vadd.f32 0.0, %v810
      %v812 = vpop.f32.mrb[0].mxu0
      %v813 = vpop.f32.mrb[0].mxu0
      %v814 = vadd.f32 0.0, %v813
      %v815 = vpop.f32.mrb[0].mxu0
      %816 = vdwg.mxu0
      %v817 = vpack.c.bf16 %v694, %v691
      %v818 = vpack.c.bf16 %v702, %v699
      %v819 = vpack.c.bf16 %v710, %v707
      %v820 = vpack.c.bf16 %v718, %v715
      %v821 = vpack.c.bf16 %v726, %v723
      %v822 = vpack.c.bf16 %v734, %v731
      %v823 = vpack.c.bf16 %v742, %v739
      %v824 = vpack.c.bf16 %v750, %v747
      %v825 = vpack.c.bf16 %v758, %v755
      %v826 = vpack.c.bf16 %v766, %v763
      %v827 = vpack.c.bf16 %v774, %v771
      %v828 = vpack.c.bf16 %v782, %v779
      %v829 = vpack.c.bf16 %v790, %v787
      %v830 = vpack.c.bf16 %v798, %v795
      %v831 = vpack.c.bf16 %v806, %v803
      %v832 = vpack.c.bf16 %v814, %v811
      %s833 = smul.u32 %s22, 16
      %s834 = smul.addr %s833, 4
      %s835 = scalar_lea.vmem %s2, %s834
      %v836 = vld [vmem:[%s835] sm:$0xf]
      %v837 = vld [vmem:[%s835 + $0x4] sm:$0xf]
      %v838 = vld [vmem:[%s835 + $0x8] sm:$0xf]
      %v839 = vld [vmem:[%s835 + $0xc] sm:$0xf]
      %v840 = vld [vmem:[%s835 + $0x10] sm:$0xf]
      %v841 = vld [vmem:[%s835 + $0x14] sm:$0xf]
      %v842 = vld [vmem:[%s835 + $0x18] sm:$0xf]
      %v843 = vld [vmem:[%s835 + $0x1c] sm:$0xf]
      %v844 = vld [vmem:[%s835 + $0x20] sm:$0xf]
      %v845 = vld [vmem:[%s835 + $0x24] sm:$0xf]
      %v846 = vld [vmem:[%s835 + $0x28] sm:$0xf]
      %v847 = vld [vmem:[%s835 + $0x2c] sm:$0xf]
      %v848 = vld [vmem:[%s835 + $0x30] sm:$0xf]
      %v849 = vld [vmem:[%s835 + $0x34] sm:$0xf]
      %v850 = vld [vmem:[%s835 + $0x38] sm:$0xf]
      %v851 = vld [vmem:[%s835 + $0x3c] sm:$0xf]
      %s852 = scalar_lea.vmem %s3, %s22
      %v853 = vld [vmem:[%s852] sm:$0x1]
      %v855 = vlaneseq
      %v856 = vshrl.u32 %v855, 7
      %v857 = vsub.s32 0, %v856
      %v858 = vrot.slane %v853, %v857
      %v876 = vunpack.c.l.b16 %v836
      %v877 = vunpack.c.l.b16 %v837
      %v878 = vunpack.c.l.b16 %v838
      %v879 = vunpack.c.l.b16 %v839
      %v880 = vunpack.c.l.b16 %v840
      %v881 = vunpack.c.l.b16 %v841
      %v882 = vunpack.c.l.b16 %v842
      %v883 = vunpack.c.l.b16 %v843
      %v884 = vunpack.c.l.b16 %v844
      %v885 = vunpack.c.l.b16 %v845
      %v886 = vunpack.c.l.b16 %v846
      %v887 = vunpack.c.l.b16 %v847
      %v888 = vunpack.c.l.b16 %v848
      %v889 = vunpack.c.l.b16 %v849
      %v890 = vunpack.c.l.b16 %v850
      %v891 = vunpack.c.l.b16 %v851
      %v892 = vpack.c.b16 %v877, %v876
      %v893 = vpack.c.b16 %v879, %v878
      %v894 = vpack.c.b16 %v881, %v880
      %v895 = vpack.c.b16 %v883, %v882
      %v896 = vpack.c.b16 %v885, %v884
      %v897 = vpack.c.b16 %v887, %v886
      %v898 = vpack.c.b16 %v889, %v888
      %v899 = vpack.c.b16 %v891, %v890
      %908 = vmatprep.subr.bf16.mxu0 0
      %909 = vmatpush1.bf16.msra.mxu0 %v892
      %910 = vmatprep.subr.bf16.mxu0 0
      %911 = vmatpush1.bf16.msra.mxu0 %v893
      %912 = vmatprep.subr.bf16.mxu0 0
      %913 = vmatpush1.bf16.msra.mxu0 %v894
      %914 = vmatprep.subr.bf16.mxu0 0
      %915 = vmatpush1.bf16.msra.mxu0 %v895
      %916 = vmatprep.subr.bf16.mxu0 0
      %917 = vmatpush1.bf16.msra.mxu0 %v896
      %918 = vmatprep.subr.bf16.mxu0 0
      %919 = vmatpush1.bf16.msra.mxu0 %v897
      %920 = vmatprep.subr.bf16.mxu0 0
      %921 = vmatpush1.bf16.msra.mxu0 %v898
      %922 = vmatprep.subr.bf16.mxu0 0
      %923 = vmatpush1.bf16.msra.mxu0 %v899
      %924 = vmatprep.subr.bf16.mxu0 0
      %925 = vmatpush1.bf16.msra.mxu0 0
      %926 = vmatprep.subr.bf16.mxu0 0
      %927 = vmatpush1.bf16.msra.mxu0 0
      %928 = vmatprep.subr.bf16.mxu0 0
      %929 = vmatpush1.bf16.msra.mxu0 0
      %930 = vmatprep.subr.bf16.mxu0 0
      %931 = vmatpush1.bf16.msra.mxu0 0
      %932 = vmatprep.subr.bf16.mxu0 0
      %933 = vmatpush1.bf16.msra.mxu0 0
      %934 = vmatprep.subr.bf16.mxu0 0
      %935 = vmatpush1.bf16.msra.mxu0 0
      %936 = vmatprep.subr.bf16.mxu0 0
      %937 = vmatpush1.bf16.msra.mxu0 0
      %938 = vmatprep.subr.bf16.mxu0 0
      %939 = vmatpush1.bf16.msra.mxu0 0
      %940 = vmatprep.mubr.bf16.mxu0 0
      %941 = vmatmul.mubr.bf16.gmra.mrb[0].mxu0 %v817
      %v942 = vpop.f32.mrb[0].mxu0
      %v943 = vadd.f32 %v858, %v942
      %v944 = vpop.f32.mrb[0].mxu0
      %v945 = vpop.f32.mrb[0].mxu0
      %v946 = vadd.f32 %v858, %v945
      %v947 = vpop.f32.mrb[0].mxu0
      %948 = vmatprep.mubr.bf16.mxu0 0
      %949 = vmatmul.mubr.bf16.gmra.mrb[0].mxu0 %v818
      %v950 = vpop.f32.mrb[0].mxu0
      %v951 = vadd.f32 %v858, %v950
      %v952 = vpop.f32.mrb[0].mxu0
      %v953 = vpop.f32.mrb[0].mxu0
      %v954 = vadd.f32 %v858, %v953
      %v955 = vpop.f32.mrb[0].mxu0
      %956 = vmatprep.mubr.bf16.mxu0 0
      %957 = vmatmul.mubr.bf16.gmra.mrb[0].mxu0 %v819
      %v958 = vpop.f32.mrb[0].mxu0
      %v959 = vadd.f32 %v858, %v958
      %v960 = vpop.f32.mrb[0].mxu0
      %v961 = vpop.f32.mrb[0].mxu0
      %v962 = vadd.f32 %v858, %v961
      %v963 = vpop.f32.mrb[0].mxu0
      %964 = vmatprep.mubr.bf16.mxu0 0
      %965 = vmatmul.mubr.bf16.gmra.mrb[0].mxu0 %v820
      %v966 = vpop.f32.mrb[0].mxu0
      %v967 = vadd.f32 %v858, %v966
      %v968 = vpop.f32.mrb[0].mxu0
      %v969 = vpop.f32.mrb[0].mxu0
      %v970 = vadd.f32 %v858, %v969
      %v971 = vpop.f32.mrb[0].mxu0
      %972 = vmatprep.mubr.bf16.mxu0 0
      %973 = vmatmul.mubr.bf16.gmra.mrb[0].mxu0 %v821
      %v974 = vpop.f32.mrb[0].mxu0
      %v975 = vadd.f32 %v858, %v974
      %v976 = vpop.f32.mrb[0].mxu0
      %v977 = vpop.f32.mrb[0].mxu0
      %v978 = vadd.f32 %v858, %v977
      %v979 = vpop.f32.mrb[0].mxu0
      %980 = vmatprep.mubr.bf16.mxu0 0
      %981 = vmatmul.mubr.bf16.gmra.mrb[0].mxu0 %v822
      %v982 = vpop.f32.mrb[0].mxu0
      %v983 = vadd.f32 %v858, %v982
      %v984 = vpop.f32.mrb[0].mxu0
      %v985 = vpop.f32.mrb[0].mxu0
      %v986 = vadd.f32 %v858, %v985
      %v987 = vpop.f32.mrb[0].mxu0
      %988 = vmatprep.mubr.bf16.mxu0 0
      %989 = vmatmul.mubr.bf16.gmra.mrb[0].mxu0 %v823
      %v990 = vpop.f32.mrb[0].mxu0
      %v991 = vadd.f32 %v858, %v990
      %v992 = vpop.f32.mrb[0].mxu0
      %v993 = vpop.f32.mrb[0].mxu0
      %v994 = vadd.f32 %v858, %v993
      %v995 = vpop.f32.mrb[0].mxu0
      %996 = vmatprep.mubr.bf16.mxu0 0
      %997 = vmatmul.mubr.bf16.gmra.mrb[0].mxu0 %v824
      %v998 = vpop.f32.mrb[0].mxu0
      %v999 = vadd.f32 %v858, %v998
      %v1000 = vpop.f32.mrb[0].mxu0
      %v1001 = vpop.f32.mrb[0].mxu0
      %v1002 = vadd.f32 %v858, %v1001
      %v1003 = vpop.f32.mrb[0].mxu0
      %1004 = vmatprep.mubr.bf16.mxu0 0
      %1005 = vmatmul.mubr.bf16.gmra.mrb[0].mxu0 %v825
      %v1006 = vpop.f32.mrb[0].mxu0
      %v1007 = vadd.f32 %v858, %v1006
      %v1008 = vpop.f32.mrb[0].mxu0
      %v1009 = vpop.f32.mrb[0].mxu0
      %v1010 = vadd.f32 %v858, %v1009
      %v1011 = vpop.f32.mrb[0].mxu0
      %1012 = vmatprep.mubr.bf16.mxu0 0
      %1013 = vmatmul.mubr.bf16.gmra.mrb[0].mxu0 %v826
      %v1014 = vpop.f32.mrb[0].mxu0
      %v1015 = vadd.f32 %v858, %v1014
      %v1016 = vpop.f32.mrb[0].mxu0
      %v1017 = vpop.f32.mrb[0].mxu0
      %v1018 = vadd.f32 %v858, %v1017
      %v1019 = vpop.f32.mrb[0].mxu0
      %1020 = vmatprep.mubr.bf16.mxu0 0
      %1021 = vmatmul.mubr.bf16.gmra.mrb[0].mxu0 %v827
      %v1022 = vpop.f32.mrb[0].mxu0
      %v1023 = vadd.f32 %v858, %v1022
      %v1024 = vpop.f32.mrb[0].mxu0
      %v1025 = vpop.f32.mrb[0].mxu0
      %v1026 = vadd.f32 %v858, %v1025
      %v1027 = vpop.f32.mrb[0].mxu0
      %1028 = vmatprep.mubr.bf16.mxu0 0
      %1029 = vmatmul.mubr.bf16.gmra.mrb[0].mxu0 %v828
      %v1030 = vpop.f32.mrb[0].mxu0
      %v1031 = vadd.f32 %v858, %v1030
      %v1032 = vpop.f32.mrb[0].mxu0
      %v1033 = vpop.f32.mrb[0].mxu0
      %v1034 = vadd.f32 %v858, %v1033
      %v1035 = vpop.f32.mrb[0].mxu0
      %1036 = vmatprep.mubr.bf16.mxu0 0
      %1037 = vmatmul.mubr.bf16.gmra.mrb[0].mxu0 %v829
      %v1038 = vpop.f32.mrb[0].mxu0
      %v1039 = vadd.f32 %v858, %v1038
      %v1040 = vpop.f32.mrb[0].mxu0
      %v1041 = vpop.f32.mrb[0].mxu0
      %v1042 = vadd.f32 %v858, %v1041
      %v1043 = vpop.f32.mrb[0].mxu0
      %1044 = vmatprep.mubr.bf16.mxu0 0
      %1045 = vmatmul.mubr.bf16.gmra.mrb[0].mxu0 %v830
      %v1046 = vpop.f32.mrb[0].mxu0
      %v1047 = vadd.f32 %v858, %v1046
      %v1048 = vpop.f32.mrb[0].mxu0
      %v1049 = vpop.f32.mrb[0].mxu0
      %v1050 = vadd.f32 %v858, %v1049
      %v1051 = vpop.f32.mrb[0].mxu0
      %1052 = vmatprep.mubr.bf16.mxu0 0
      %1053 = vmatmul.mubr.bf16.gmra.mrb[0].mxu0 %v831
      %v1054 = vpop.f32.mrb[0].mxu0
      %v1055 = vadd.f32 %v858, %v1054
      %v1056 = vpop.f32.mrb[0].mxu0
      %v1057 = vpop.f32.mrb[0].mxu0
      %v1058 = vadd.f32 %v858, %v1057
      %v1059 = vpop.f32.mrb[0].mxu0
      %1060 = vmatprep.mubr.bf16.mxu0 0
      %1061 = vmatmul.mubr.bf16.gmra.mrb[0].mxu0 %v832
      %v1062 = vpop.f32.mrb[0].mxu0
      %v1063 = vadd.f32 %v858, %v1062
      %v1064 = vpop.f32.mrb[0].mxu0
      %v1065 = vpop.f32.mrb[0].mxu0
      %v1066 = vadd.f32 %v858, %v1065
      %v1067 = vpop.f32.mrb[0].mxu0
      %1068 = vdwg.mxu0
      %v1069 = vmax.f32 %v943, 0.0
      %v1070 = vmax.f32 %v946, 0.0
      %v1071 = vmax.f32 %v951, 0.0
      %v1072 = vmax.f32 %v954, 0.0
      %v1073 = vmax.f32 %v959, 0.0
      %v1074 = vmax.f32 %v962, 0.0
      %v1075 = vmax.f32 %v967, 0.0
      %v1076 = vmax.f32 %v970, 0.0
      %v1077 = vmax.f32 %v975, 0.0
      %v1078 = vmax.f32 %v978, 0.0
      %v1079 = vmax.f32 %v983, 0.0
      %v1080 = vmax.f32 %v986, 0.0
      %v1081 = vmax.f32 %v991, 0.0
      %v1082 = vmax.f32 %v994, 0.0
      %v1083 = vmax.f32 %v999, 0.0
      %v1084 = vmax.f32 %v1002, 0.0
      %v1085 = vmax.f32 %v1007, 0.0
      %v1086 = vmax.f32 %v1010, 0.0
      %v1087 = vmax.f32 %v1015, 0.0
      %v1088 = vmax.f32 %v1018, 0.0
      %v1089 = vmax.f32 %v1023, 0.0
      %v1090 = vmax.f32 %v1026, 0.0
      %v1091 = vmax.f32 %v1031, 0.0
      %v1092 = vmax.f32 %v1034, 0.0
      %v1093 = vmax.f32 %v1039, 0.0
      %v1094 = vmax.f32 %v1042, 0.0
      %v1095 = vmax.f32 %v1047, 0.0
      %v1096 = vmax.f32 %v1050, 0.0
      %v1097 = vmax.f32 %v1055, 0.0
      %v1098 = vmax.f32 %v1058, 0.0
      %v1099 = vmax.f32 %v1063, 0.0
      %v1100 = vmax.f32 %v1066, 0.0
      %v1101 = vpack.c.bf16 %v1070, %v1069
      %v1102 = vpack.c.bf16 %v1072, %v1071
      %v1103 = vpack.c.bf16 %v1074, %v1073
      %v1104 = vpack.c.bf16 %v1076, %v1075
      %v1105 = vpack.c.bf16 %v1078, %v1077
      %v1106 = vpack.c.bf16 %v1080, %v1079
      %v1107 = vpack.c.bf16 %v1082, %v1081
      %v1108 = vpack.c.bf16 %v1084, %v1083
      %v1109 = vpack.c.bf16 %v1086, %v1085
      %v1110 = vpack.c.bf16 %v1088, %v1087
      %v1111 = vpack.c.bf16 %v1090, %v1089
      %v1112 = vpack.c.bf16 %v1092, %v1091
      %v1113 = vpack.c.bf16 %v1094, %v1093
      %v1114 = vpack.c.bf16 %v1096, %v1095
      %v1115 = vpack.c.bf16 %v1098, %v1097
      %v1116 = vpack.c.bf16 %v1100, %v1099
      %p1117 = scmp.eq.s32.totalorder %s443, 0
      // Predicated region
      $region53: #{gcn_forward.1} parent=47 // pred_check
        %p1118 = pneg %p1117
      $region54: #{gcn_forward.1} parent=47 // pred_check_branch
        %1120 = sbr.rel (%p1118) target = $region56
      $region55: #{gcn_forward.1} parent=47 // pred_region
        %s1121 = sshra.s32 %s444, 4
        %s1122 = sand.u32 %s444, 15
        %s1123 = sadd.s32 %s1121, 16
        %s1124 = smul.addr %s1123, 8
        %s1125 = scalar_lea.vmem [#allocation2], %s1124
        %1126 = vst [vmem:[%s1125] sm:$0xff] %v1101
        %1127 = vst [vmem:[%s1125 + $0x8] sm:$0xff] %v1102
        %1128 = vst [vmem:[%s1125 + $0x10] sm:$0xff] %v1103
        %1129 = vst [vmem:[%s1125 + $0x18] sm:$0xff] %v1104
        %1130 = vst [vmem:[%s1125 + $0x20] sm:$0xff] %v1105
        %1131 = vst [vmem:[%s1125 + $0x28] sm:$0xff] %v1106
        %1132 = vst [vmem:[%s1125 + $0x30] sm:$0xff] %v1107
        %1133 = vst [vmem:[%s1125 + $0x38] sm:$0xff] %v1108
        %1134 = vst [vmem:[%s1125 + $0x40] sm:$0xff] %v1109
        %1135 = vst [vmem:[%s1125 + $0x48] sm:$0xff] %v1110
        %1136 = vst [vmem:[%s1125 + $0x50] sm:$0xff] %v1111
        %1137 = vst [vmem:[%s1125 + $0x58] sm:$0xff] %v1112
        %1138 = vst [vmem:[%s1125 + $0x60] sm:$0xff] %v1113
        %1139 = vst [vmem:[%s1125 + $0x68] sm:$0xff] %v1114
        %1140 = vst [vmem:[%s1125 + $0x70] sm:$0xff] %v1115
        %1141 = vst [vmem:[%s1125 + $0x78] sm:$0xff] %v1116
      $region56: #{gcn_forward.1} parent=47 // pred_fallthru
        _
      %p1142 = scmp.eq.s32.totalorder %s443, 1
      // Predicated region
      $region57: #{gcn_forward.1} parent=47 // pred_check
        %p1143 = pneg %p1142
      $region58: #{gcn_forward.1} parent=47 // pred_check_branch
        %1145 = sbr.rel (%p1143) target = $region60
      $region59: #{gcn_forward.1} parent=47 // pred_region
        %s1146 = sshra.s32 %s444, 4
        %s1147 = sand.u32 %s444, 15
        %s1148 = smul.addr %s1146, 8
        %s1149 = scalar_lea.vmem [#allocation2], %s1148
        %1150 = vst [vmem:[%s1149] sm:$0xff] %v1101
        %1151 = vst [vmem:[%s1149 + $0x8] sm:$0xff] %v1102
        %1152 = vst [vmem:[%s1149 + $0x10] sm:$0xff] %v1103
        %1153 = vst [vmem:[%s1149 + $0x18] sm:$0xff] %v1104
        %1154 = vst [vmem:[%s1149 + $0x20] sm:$0xff] %v1105
        %1155 = vst [vmem:[%s1149 + $0x28] sm:$0xff] %v1106
        %1156 = vst [vmem:[%s1149 + $0x30] sm:$0xff] %v1107
        %1157 = vst [vmem:[%s1149 + $0x38] sm:$0xff] %v1108
        %1158 = vst [vmem:[%s1149 + $0x40] sm:$0xff] %v1109
        %1159 = vst [vmem:[%s1149 + $0x48] sm:$0xff] %v1110
        %1160 = vst [vmem:[%s1149 + $0x50] sm:$0xff] %v1111
        %1161 = vst [vmem:[%s1149 + $0x58] sm:$0xff] %v1112
        %1162 = vst [vmem:[%s1149 + $0x60] sm:$0xff] %v1113
        %1163 = vst [vmem:[%s1149 + $0x68] sm:$0xff] %v1114
        %1164 = vst [vmem:[%s1149 + $0x70] sm:$0xff] %v1115
        %1165 = vst [vmem:[%s1149 + $0x78] sm:$0xff] %v1116
      $region60: #{gcn_forward.1} parent=47 // pred_fallthru
        _
      %p1166 = scmp.eq.s32.totalorder %s22, 2
      %p1167 = pnand %p1166, %p283
      %p1168 = pneg %p1167
      // Predicated region
      $region61: #{gcn_forward.1} parent=47 // pred_check
        _
      $region62: #{gcn_forward.1} parent=47 // pred_check_branch
        %1170 = sbr.rel (%p1167) target = $region64
      $region63: #{gcn_forward.1} parent=47 // pred_region
        %s1171 = scalar_lea.vmem [#allocation2], 128
        %v1172 = vld [vmem:[%s1171] sm:$0xff]
        %v1173 = vld [vmem:[%s1171 + $0x8] sm:$0xff]
        %v1174 = vld [vmem:[%s1171 + $0x10] sm:$0xff]
        %v1175 = vld [vmem:[%s1171 + $0x18] sm:$0xff]
        %v1176 = vld [vmem:[%s1171 + $0x20] sm:$0xff]
        %v1177 = vld [vmem:[%s1171 + $0x28] sm:$0xff]
        %v1178 = vld [vmem:[%s1171 + $0x30] sm:$0xff]
        %v1179 = vld [vmem:[%s1171 + $0x38] sm:$0xff]
        %v1180 = vld [vmem:[%s1171 + $0x40] sm:$0xff]
        %v1181 = vld [vmem:[%s1171 + $0x48] sm:$0xff]
        %v1182 = vld [vmem:[%s1171 + $0x50] sm:$0xff]
        %v1183 = vld [vmem:[%s1171 + $0x58] sm:$0xff]
        %v1184 = vld [vmem:[%s1171 + $0x60] sm:$0xff]
        %v1185 = vld [vmem:[%s1171 + $0x68] sm:$0xff]
        %v1186 = vld [vmem:[%s1171 + $0x70] sm:$0xff]
        %v1187 = vld [vmem:[%s1171 + $0x78] sm:$0xff]
        %v1188 = vld [vmem:[%s4] sm:$0xff]
        %v1190 = vunpack.c.l.b16 %v1188
        %v1191 = vunpack.c.h.b16 %v1188
        %v1192 = vpack.c.b16 %v1190, %v1190
        %v1193 = vpack.c.b16 %v1191, %v1191
        %1196 = vmatprep.subr.bf16.mxu0 0
        %1197 = vmatpush1.bf16.msra.mxu0 %v1172
        %1198 = vmatprep.subr.bf16.mxu0 0
        %1199 = vmatpush1.bf16.msra.mxu0 %v1173
        %1200 = vmatprep.subr.bf16.mxu0 0
        %1201 = vmatpush1.bf16.msra.mxu0 %v1174
        %1202 = vmatprep.subr.bf16.mxu0 0
        %1203 = vmatpush1.bf16.msra.mxu0 %v1175
        %1204 = vmatprep.subr.bf16.mxu0 0
        %1205 = vmatpush1.bf16.msra.mxu0 %v1176
        %1206 = vmatprep.subr.bf16.mxu0 0
        %1207 = vmatpush1.bf16.msra.mxu0 %v1177
        %1208 = vmatprep.subr.bf16.mxu0 0
        %1209 = vmatpush1.bf16.msra.mxu0 %v1178
        %1210 = vmatprep.subr.bf16.mxu0 0
        %1211 = vmatpush1.bf16.msra.mxu0 %v1179
        %1212 = vmatprep.subr.bf16.mxu0 0
        %1213 = vmatpush1.bf16.msra.mxu0 %v1180
        %1214 = vmatprep.subr.bf16.mxu0 0
        %1215 = vmatpush1.bf16.msra.mxu0 %v1181
        %1216 = vmatprep.subr.bf16.mxu0 0
        %1217 = vmatpush1.bf16.msra.mxu0 %v1182
        %1218 = vmatprep.subr.bf16.mxu0 0
        %1219 = vmatpush1.bf16.msra.mxu0 %v1183
        %1220 = vmatprep.subr.bf16.mxu0 0
        %1221 = vmatpush1.bf16.msra.mxu0 %v1184
        %1222 = vmatprep.subr.bf16.mxu0 0
        %1223 = vmatpush1.bf16.msra.mxu0 %v1185
        %1224 = vmatprep.subr.bf16.mxu0 0
        %1225 = vmatpush1.bf16.msra.mxu0 %v1186
        %1226 = vmatprep.subr.bf16.mxu0 0
        %1227 = vmatpush1.bf16.msra.mxu0 %v1187
        %1228 = vmatprep.mubr.bf16.mxu0 %v1193
        %1229 = vmatmul.mubr.bf16.gmra.mrb[0].mxu0 %v1192
        %v1230 = vpop.f32.mrb[0].mxu0
        %v1231 = vadd.f32 0.0, %v1230
        %v1232 = vpop.f32.mrb[0].mxu0
        %v1233 = vpop.f32.mrb[0].mxu0
        %v1234 = vpop.f32.mrb[0].mxu0
        %1235 = vdwg.mxu0
        %v1236 = vpack.c.bf16 %v1231, %v1231
        %s1237 = scalar_lea.vmem %s2, 192
        %v1238 = vld [vmem:[%s1237] sm:$0xf]
        %v1239 = vld [vmem:[%s1237 + $0x4] sm:$0xf]
        %v1240 = vld [vmem:[%s1237 + $0x8] sm:$0xf]
        %v1241 = vld [vmem:[%s1237 + $0xc] sm:$0xf]
        %v1242 = vld [vmem:[%s1237 + $0x10] sm:$0xf]
        %v1243 = vld [vmem:[%s1237 + $0x14] sm:$0xf]
        %v1244 = vld [vmem:[%s1237 + $0x18] sm:$0xf]
        %v1245 = vld [vmem:[%s1237 + $0x1c] sm:$0xf]
        %v1246 = vld [vmem:[%s1237 + $0x20] sm:$0xf]
        %v1247 = vld [vmem:[%s1237 + $0x24] sm:$0xf]
        %v1248 = vld [vmem:[%s1237 + $0x28] sm:$0xf]
        %v1249 = vld [vmem:[%s1237 + $0x2c] sm:$0xf]
        %v1250 = vld [vmem:[%s1237 + $0x30] sm:$0xf]
        %v1251 = vld [vmem:[%s1237 + $0x34] sm:$0xf]
        %v1252 = vld [vmem:[%s1237 + $0x38] sm:$0xf]
        %v1253 = vld [vmem:[%s1237 + $0x3c] sm:$0xf]
        %s1254 = scalar_lea.vmem %s3, 3
        %v1255 = vld [vmem:[%s1254] sm:$0x1]
        %v1257 = vlaneseq
        %v1258 = vshrl.u32 %v1257, 7
        %v1259 = vsub.s32 0, %v1258
        %v1260 = vrot.slane %v1255, %v1259
        %v1278 = vunpack.c.l.b16 %v1238
        %v1279 = vunpack.c.l.b16 %v1239
        %v1280 = vunpack.c.l.b16 %v1240
        %v1281 = vunpack.c.l.b16 %v1241
        %v1282 = vunpack.c.l.b16 %v1242
        %v1283 = vunpack.c.l.b16 %v1243
        %v1284 = vunpack.c.l.b16 %v1244
        %v1285 = vunpack.c.l.b16 %v1245
        %v1286 = vunpack.c.l.b16 %v1246
        %v1287 = vunpack.c.l.b16 %v1247
        %v1288 = vunpack.c.l.b16 %v1248
        %v1289 = vunpack.c.l.b16 %v1249
        %v1290 = vunpack.c.l.b16 %v1250
        %v1291 = vunpack.c.l.b16 %v1251
        %v1292 = vunpack.c.l.b16 %v1252
        %v1293 = vunpack.c.l.b16 %v1253
        %v1294 = vpack.c.b16 %v1279, %v1278
        %v1295 = vpack.c.b16 %v1281, %v1280
        %v1296 = vpack.c.b16 %v1283, %v1282
        %v1297 = vpack.c.b16 %v1285, %v1284
        %v1298 = vpack.c.b16 %v1287, %v1286
        %v1299 = vpack.c.b16 %v1289, %v1288
        %v1300 = vpack.c.b16 %v1291, %v1290
        %v1301 = vpack.c.b16 %v1293, %v1292
        %1310 = vmatprep.subr.bf16.mxu0 0
        %1311 = vmatpush1.bf16.msra.mxu0 %v1294
        %1312 = vmatprep.subr.bf16.mxu0 0
        %1313 = vmatpush1.bf16.msra.mxu0 %v1295
        %1314 = vmatprep.subr.bf16.mxu0 0
        %1315 = vmatpush1.bf16.msra.mxu0 %v1296
        %1316 = vmatprep.subr.bf16.mxu0 0
        %1317 = vmatpush1.bf16.msra.mxu0 %v1297
        %1318 = vmatprep.subr.bf16.mxu0 0
        %1319 = vmatpush1.bf16.msra.mxu0 %v1298
        %1320 = vmatprep.subr.bf16.mxu0 0
        %1321 = vmatpush1.bf16.msra.mxu0 %v1299
        %1322 = vmatprep.subr.bf16.mxu0 0
        %1323 = vmatpush1.bf16.msra.mxu0 %v1300
        %1324 = vmatprep.subr.bf16.mxu0 0
        %1325 = vmatpush1.bf16.msra.mxu0 %v1301
        %1326 = vmatprep.subr.bf16.mxu0 0
        %1327 = vmatpush1.bf16.msra.mxu0 0
        %1328 = vmatprep.subr.bf16.mxu0 0
        %1329 = vmatpush1.bf16.msra.mxu0 0
        %1330 = vmatprep.subr.bf16.mxu0 0
        %1331 = vmatpush1.bf16.msra.mxu0 0
        %1332 = vmatprep.subr.bf16.mxu0 0
        %1333 = vmatpush1.bf16.msra.mxu0 0
        %1334 = vmatprep.subr.bf16.mxu0 0
        %1335 = vmatpush1.bf16.msra.mxu0 0
        %1336 = vmatprep.subr.bf16.mxu0 0
        %1337 = vmatpush1.bf16.msra.mxu0 0
        %1338 = vmatprep.subr.bf16.mxu0 0
        %1339 = vmatpush1.bf16.msra.mxu0 0
        %1340 = vmatprep.subr.bf16.mxu0 0
        %1341 = vmatpush1.bf16.msra.mxu0 0
        %1342 = vmatprep.mubr.bf16.mxu0 0
        %1343 = vmatmul.mubr.bf16.gmra.mrb[0].mxu0 %v1236
        %v1344 = vpop.f32.mrb[0].mxu0
        %v1345 = vadd.f32 %v1260, %v1344
        %v1346 = vpop.f32.mrb[0].mxu0
        %v1347 = vpop.f32.mrb[0].mxu0
        %v1348 = vpop.f32.mrb[0].mxu0
        %1349 = vdwg.mxu0
        %v1350 = vpack.c.bf16 %v1345, %v1345
        %v1351 = vld [vmem:[%s5] sm:$0xf]
        %v1352 = vld [vmem:[%s5 + $0x4] sm:$0xf]
        %v1353 = vld [vmem:[%s5 + $0x8] sm:$0xf]
        %v1354 = vld [vmem:[%s5 + $0xc] sm:$0xf]
        %v1355 = vld [vmem:[%s5 + $0x10] sm:$0xf]
        %v1356 = vld [vmem:[%s5 + $0x14] sm:$0xf]
        %v1357 = vld [vmem:[%s5 + $0x18] sm:$0xf]
        %v1358 = vld [vmem:[%s5 + $0x1c] sm:$0xf]
        %v1359 = vld [vmem:[%s5 + $0x20] sm:$0xf]
        %v1360 = vld [vmem:[%s5 + $0x24] sm:$0xf]
        %v1361 = vld [vmem:[%s5 + $0x28] sm:$0xf]
        %v1362 = vld [vmem:[%s5 + $0x2c] sm:$0xf]
        %v1363 = vld [vmem:[%s5 + $0x30] sm:$0xf]
        %v1364 = vld [vmem:[%s5 + $0x34] sm:$0xf]
        %v1365 = vld [vmem:[%s5 + $0x38] sm:$0xf]
        %v1366 = vld [vmem:[%s5 + $0x3c] sm:$0xf]
        %v1367 = vld [vmem:[%s6] sm:$0x1]
        %v1369 = vlaneseq
        %v1370 = vshrl.u32 %v1369, 7
        %v1371 = vsub.s32 0, %v1370
        %v1372 = vrot.slane %v1367, %v1371
        %v1390 = vunpack.c.l.b16 %v1351
        %v1391 = vunpack.c.l.b16 %v1352
        %v1392 = vunpack.c.l.b16 %v1353
        %v1393 = vunpack.c.l.b16 %v1354
        %v1394 = vunpack.c.l.b16 %v1355
        %v1395 = vunpack.c.l.b16 %v1356
        %v1396 = vunpack.c.l.b16 %v1357
        %v1397 = vunpack.c.l.b16 %v1358
        %v1398 = vunpack.c.l.b16 %v1359
        %v1399 = vunpack.c.l.b16 %v1360
        %v1400 = vunpack.c.l.b16 %v1361
        %v1401 = vunpack.c.l.b16 %v1362
        %v1402 = vunpack.c.l.b16 %v1363
        %v1403 = vunpack.c.l.b16 %v1364
        %v1404 = vunpack.c.l.b16 %v1365
        %v1405 = vunpack.c.l.b16 %v1366
        %v1406 = vpack.c.b16 %v1391, %v1390
        %v1407 = vpack.c.b16 %v1393, %v1392
        %v1408 = vpack.c.b16 %v1395, %v1394
        %v1409 = vpack.c.b16 %v1397, %v1396
        %v1410 = vpack.c.b16 %v1399, %v1398
        %v1411 = vpack.c.b16 %v1401, %v1400
        %v1412 = vpack.c.b16 %v1403, %v1402
        %v1413 = vpack.c.b16 %v1405, %v1404
        %1422 = vmatprep.subr.bf16.mxu0 0
        %1423 = vmatpush1.bf16.msra.mxu0 %v1406
        %1424 = vmatprep.subr.bf16.mxu0 0
        %1425 = vmatpush1.bf16.msra.mxu0 %v1407
        %1426 = vmatprep.subr.bf16.mxu0 0
        %1427 = vmatpush1.bf16.msra.mxu0 %v1408
        %1428 = vmatprep.subr.bf16.mxu0 0
        %1429 = vmatpush1.bf16.msra.mxu0 %v1409
        %1430 = vmatprep.subr.bf16.mxu0 0
        %1431 = vmatpush1.bf16.msra.mxu0 %v1410
        %1432 = vmatprep.subr.bf16.mxu0 0
        %1433 = vmatpush1.bf16.msra.mxu0 %v1411
        %1434 = vmatprep.subr.bf16.mxu0 0
        %1435 = vmatpush1.bf16.msra.mxu0 %v1412
        %1436 = vmatprep.subr.bf16.mxu0 0
        %1437 = vmatpush1.bf16.msra.mxu0 %v1413
        %1438 = vmatprep.subr.bf16.mxu0 0
        %1439 = vmatpush1.bf16.msra.mxu0 0
        %1440 = vmatprep.subr.bf16.mxu0 0
        %1441 = vmatpush1.bf16.msra.mxu0 0
        %1442 = vmatprep.subr.bf16.mxu0 0
        %1443 = vmatpush1.bf16.msra.mxu0 0
        %1444 = vmatprep.subr.bf16.mxu0 0
        %1445 = vmatpush1.bf16.msra.mxu0 0
        %1446 = vmatprep.subr.bf16.mxu0 0
        %1447 = vmatpush1.bf16.msra.mxu0 0
        %1448 = vmatprep.subr.bf16.mxu0 0
        %1449 = vmatpush1.bf16.msra.mxu0 0
        %1450 = vmatprep.subr.bf16.mxu0 0
        %1451 = vmatpush1.bf16.msra.mxu0 0
        %1452 = vmatprep.subr.bf16.mxu0 0
        %1453 = vmatpush1.bf16.msra.mxu0 0
        %1454 = vmatprep.mubr.bf16.mxu0 0
        %1455 = vmatmul.mubr.bf16.gmra.mrb[0].mxu0 %v1350
        %v1456 = vpop.f32.mrb[0].mxu0
        %v1457 = vadd.f32 %v1372, %v1456
        %v1458 = vpop.f32.mrb[0].mxu0
        %v1459 = vpop.f32.mrb[0].mxu0
        %v1460 = vpop.f32.mrb[0].mxu0
        %1461 = vdwg.mxu0
        %1462 = vst [vmem:[%s7] sm:$0xff] %v1457
      $region64: #{gcn_forward.1} parent=47 // pred_fallthru
        _
      // Predicated region
      $region65: #{gcn_forward.1} parent=47 // pred_check
        %p1463 = pneg %p195
      $region66: #{gcn_forward.1} parent=47 // pred_check_branch
        %1465 = sbr.rel (%p1463) target = $region68
      $region67: #{gcn_forward.1} parent=47 // pred_region
        _
      $region68: #{gcn_forward.1} parent=47 // pred_fallthru
        _
      // Predicated region
      $region69: #{gcn_forward.1} parent=47 // pred_check
        %p1466 = pneg %p195
      $region70: #{gcn_forward.1} parent=47 // pred_check_branch
        %1468 = sbr.rel (%p1466) target = $region72
      $region71: #{gcn_forward.1} parent=47 // pred_region
        _
      $region72: #{gcn_forward.1} parent=47 // pred_fallthru
        _
    $region48: #{gcn_forward.1} parent=5 // pred_fallthru
      _
    %p1469 = scmp.le.s32.totalorder 2, %s13
    // Predicated region
    $region73: #{gcn_forward.1} parent=5 // pred_check
      %p1470 = pneg %p1469
    $region74: #{gcn_forward.1} parent=5 // pred_check_branch
      %1472 = sbr.rel (%p1470) target = $region76
    $region75: #{gcn_forward.1} parent=5 // pred_region
      %s1473 = ssub.s32 %s13, 2
    $region76: #{gcn_forward.1} parent=5 // pred_fallthru
      _
  $region6: #{gcn_forward.1} parent=0 // loop_footer
    %s17 = sadd.s32 1, %s13
  $region7: #{gcn_forward.1} parent=0 // loop_footer_branch
    %12 = sbr.rel target = $region3
  $region8: #{gcn_forward.1} parent=0 // loop_exit
    _

</llo_original>
